<compile_context>
chip_gen: v7x
topology: tpu7x:2x2x1
jax: 0.10.0
libtpu: 0.0.40
codegen_flags: <defaults>
</compile_context>

<pallas_src>
import jax
import jax.numpy as jnp
from jax.experimental import pallas as pl
from jax.experimental.pallas import tpu as pltpu


# ----------------------------------------------------------------------------
# helpers
# ----------------------------------------------------------------------------
def _round_up(v, m):
    return (v + m - 1) // m * m


def _pad2(arr, shape):
    return jnp.pad(arr, [(0, t - s) for s, t in zip(arr.shape, shape)])


def build_normalized_adjacency(edge_index, num_nodes):
    """A_norm[i, j] = 1/deg_in(i) for each edge j -> i (PyG mean aggregation)."""
    src, tgt = edge_index[0], edge_index[1]
    a = jnp.zeros((num_nodes, num_nodes), jnp.float32).at[tgt, src].add(1.0)
    deg = a.sum(axis=1, keepdims=True)
    return a / jnp.maximum(deg, 1.0)


# ----------------------------------------------------------------------------
# fused Pallas kernel
# ----------------------------------------------------------------------------
def _fused_graphsage_kernel(a_ref, x_ref, pairs_ref,
                            wl1_ref, wr1_ref, bl1_ref,
                            wl2_ref, wr2_ref, bl2_ref,
                            wsrc_ref, wdst_ref, blink_ref,
                            out_ref,
                            acc_ref, zbuf_ref, h1_ref):
    layer = pl.program_id(0)
    k = pl.program_id(1)
    k_last = pl.num_programs(1) - 1
    tk = a_ref.shape[1]

    # ---- layer-pass init: zero the accumulator, pre-project aggregation input.
    @pl.when((k == 0) & (layer == 0))
    def _init_layer1():
        acc_ref[...] = jnp.zeros_like(acc_ref)
        zbuf_ref[...] = jnp.dot(
            x_ref[...], wl1_ref[...],
            preferred_element_type=jnp.float32).astype(zbuf_ref.dtype)

    @pl.when((k == 0) & (layer == 1))
    def _init_layer2():
        acc_ref[...] = jnp.zeros_like(acc_ref)
        zbuf_ref[...] = jnp.dot(
            h1_ref[...], wl2_ref[...],
            preferred_element_type=jnp.float32).astype(zbuf_ref.dtype)

    # ---- streamed mean aggregation: acc += A[:, k-slab] @ Z[k-slab, :]
    start = pl.multiple_of(k * tk, tk)
    acc_ref[...] += jnp.dot(a_ref[...], zbuf_ref[pl.ds(start, tk), :],
                            preferred_element_type=jnp.float32)

    # ---- layer-1 finalize: self term + bias + ReLU; h1 stays resident in VMEM.
    @pl.when((k == k_last) & (layer == 0))
    def _finish_layer1():
        h1 = (acc_ref[...]
              + jnp.dot(x_ref[...], wr1_ref[...],
                        preferred_element_type=jnp.float32)
              + bl1_ref[...])
        h1_ref[...] = jnp.maximum(h1, 0.0).astype(h1_ref.dtype)

    # ---- layer-2 finalize + in-kernel pair gather + link predictor epilogue.
    @pl.when((k == k_last) & (layer == 1))
    def _finish():
        h2 = (acc_ref[...]
              + jnp.dot(h1_ref[...], wr2_ref[...],
                        preferred_element_type=jnp.float32)
              + bl2_ref[...])
        # Linear head commutes with the gather: score every node once, then
        # pick per-pair scores with a one-hot sublane reduction (lane-dense).
        s_src = jnp.dot(h2, wsrc_ref[...], preferred_element_type=jnp.float32)
        s_dst = jnp.dot(h2, wdst_ref[...], preferred_element_type=jnp.float32)
        n_pad = h2.shape[0]
        p_pad = out_ref.shape[1]
        node_ids = jax.lax.broadcasted_iota(jnp.int32, (n_pad, p_pad), 0)
        sel_src = (node_ids == pairs_ref[0:1, :]).astype(jnp.float32)
        sel_dst = (node_ids == pairs_ref[1:2, :]).astype(jnp.float32)
        logits = (jnp.sum(sel_src * s_src + sel_dst * s_dst,
                          axis=0, keepdims=True)
                  + blink_ref[...])                       # (1, P_pad) lane-dense
        out_ref[...] = 1.0 / (1.0 + jnp.exp(-logits))


# ----------------------------------------------------------------------------
# wrapper: padding, tiling, pallas_call
# ----------------------------------------------------------------------------
def graphsage_recommender_forward(params, x, edge_index, pairs, *,
                                  compute_dtype=jnp.float32):
    n, f_in = x.shape
    hidden = params["sage1_wl"].shape[1]
    f_out = params["sage2_wl"].shape[1]
    p = pairs.shape[0]

    # One common padded feature width (>=128 lanes) keeps every operand
    # lane-dense and lets scratch buffers be shared across both layers.
    f_pad = _round_up(max(f_in, hidden, f_out), 128)
    p_pad = _round_up(max(p, 1), 128)

    # Node dim + A-slab width. Slabs sized for a 64 MiB (v7x) VMEM budget.
    n_pad = _round_up(n, 8)
    if n_pad > 512:
        n_pad = _round_up(n_pad, 512)
        tk = 512
    else:
        tk = n_pad
    k_tiles = n_pad // tk

    # Dense row-normalized adjacency (exact zero padding everywhere).
    a_norm = build_normalized_adjacency(edge_index, n)
    a_p = _pad2(a_norm, (n_pad, n_pad)).astype(compute_dtype)
    x_p = _pad2(x, (n_pad, f_pad)).astype(compute_dtype)

    wl1 = _pad2(params["sage1_wl"], (f_pad, f_pad)).astype(compute_dtype)
    wr1 = _pad2(params["sage1_wr"], (f_pad, f_pad)).astype(compute_dtype)
    bl1 = _pad2(params["sage1_bl"].reshape(1, -1), (1, f_pad)).astype(jnp.float32)
    wl2 = _pad2(params["sage2_wl"], (f_pad, f_pad)).astype(compute_dtype)
    wr2 = _pad2(params["sage2_wr"], (f_pad, f_pad)).astype(compute_dtype)
    bl2 = _pad2(params["sage2_bl"].reshape(1, -1), (1, f_pad)).astype(jnp.float32)
    w_src = _pad2(params["link_w"][:f_out, :], (f_pad, 1)).astype(jnp.float32)
    w_dst = _pad2(params["link_w"][f_out:, :], (f_pad, 1)).astype(jnp.float32)
    b_link = params["link_b"].reshape(1, 1).astype(jnp.float32)

    pairs_p = jnp.zeros((2, p_pad), jnp.int32).at[:, :p].set(
        pairs.T.astype(jnp.int32))

    def _full(shape):
        return pl.BlockSpec(shape, lambda l, k: (0, 0))

    in_specs = [
        pl.BlockSpec((n_pad, tk), lambda l, k: (0, k)),   # A_norm column slab
        _full((n_pad, f_pad)),                            # X (resident)
        _full((2, p_pad)),                                # pair indices
        _full((f_pad, f_pad)), _full((f_pad, f_pad)), _full((1, f_pad)),  # L1
        _full((f_pad, f_pad)), _full((f_pad, f_pad)), _full((1, f_pad)),  # L2
        _full((f_pad, 1)), _full((f_pad, 1)), _full((1, 1)),              # link
    ]
    out_specs = pl.BlockSpec((1, p_pad), lambda l, k: (0, 0))

    itemsize = jnp.dtype(compute_dtype).itemsize
    flops = int(2 * (2 * n_pad * n_pad * f_pad)          # A @ Z per layer
                + 2 * (4 * n_pad * f_pad * f_pad)        # Z-proj + self-proj
                + 2 * (2 * n_pad * f_pad))               # node link scores
    bytes_accessed = int(
        2 * n_pad * n_pad * itemsize                     # A, once per layer pass
        + n_pad * f_pad * itemsize                       # X
        + 4 * f_pad * f_pad * itemsize                   # Wl1, Wr1, Wl2, Wr2
        + (2 * f_pad + 2 * f_pad + 1) * 4                # biases + link weights
        + 2 * p_pad * 4                                  # pairs
        + p_pad * 4)                                     # output
    cost = pl.CostEstimate(flops=flops, transcendentals=int(p_pad),
                           bytes_accessed=bytes_accessed)

    out = pl.pallas_call(
        _fused_graphsage_kernel,
        out_shape=jax.ShapeDtypeStruct((1, p_pad), jnp.float32),
        grid_spec=pltpu.PrefetchScalarGridSpec(
            num_scalar_prefetch=0,
            grid=(2, k_tiles),                 # (layer pass, A column slab)
            in_specs=in_specs,
            out_specs=out_specs,
            scratch_shapes=[
                pltpu.VMEM((n_pad, f_pad), jnp.float32),     # aggregation acc
                pltpu.VMEM((n_pad, f_pad), compute_dtype),   # Z = input @ W_l
                pltpu.VMEM((n_pad, f_pad), compute_dtype),   # h1 (layer-1 out)
            ],
        ),
        compiler_params=pltpu.CompilerParams(
            dimension_semantics=("arbitrary", "arbitrary")),
        cost_estimate=cost,
    )(a_p, x_p, pairs_p, wl1, wr1, bl1, wl2, wr2, bl2, w_src, w_dst, b_link)

    return out[0, :p]


# ----------------------------------------------------------------------------
# pure-JAX reference for correctness check
# ----------------------------------------------------------------------------
def reference_forward(params, x, edge_index, pairs):
    n = x.shape[0]
    a_norm = build_normalized_adjacency(edge_index, n)

    def sage(a, x_, wl, wr, bl):
        return (a @ x_) @ wl + x_ @ wr + bl

    h = jax.nn.relu(sage(a_norm, x, params["sage1_wl"], params["sage1_wr"],
                         params["sage1_bl"]))
    h = sage(a_norm, h, params["sage2_wl"], params["sage2_wr"],
             params["sage2_bl"])
    edge_emb = jnp.concatenate([h[pairs[:, 0]], h[pairs[:, 1]]], axis=1)
    logits = edge_emb @ params["link_w"] + params["link_b"]
    return jax.nn.sigmoid(logits).squeeze()


# ----------------------------------------------------------------------------
# main
# ----------------------------------------------------------------------------
if __name__ == "__main__":
    IN_CHANNELS, HIDDEN_CHANNELS, OUT_CHANNELS = 16, 32, 16
    NUM_NODES = 8

    key = jax.random.PRNGKey(0)
    keys = jax.random.split(key, 9)

    params = {
        "sage1_wl": 0.1 * jax.random.normal(keys[0], (IN_CHANNELS, HIDDEN_CHANNELS), jnp.float32),
        "sage1_wr": 0.1 * jax.random.normal(keys[1], (IN_CHANNELS, HIDDEN_CHANNELS), jnp.float32),
        "sage1_bl": 0.1 * jax.random.normal(keys[2], (HIDDEN_CHANNELS,), jnp.float32),
        "sage2_wl": 0.1 * jax.random.normal(keys[3], (HIDDEN_CHANNELS, OUT_CHANNELS), jnp.float32),
        "sage2_wr": 0.1 * jax.random.normal(keys[4], (HIDDEN_CHANNELS, OUT_CHANNELS), jnp.float32),
        "sage2_bl": 0.1 * jax.random.normal(keys[5], (OUT_CHANNELS,), jnp.float32),
        "link_w":   0.1 * jax.random.normal(keys[6], (OUT_CHANNELS * 2, 1), jnp.float32),
        "link_b":   0.1 * jax.random.normal(keys[7], (1,), jnp.float32),
    }

    # Node features and a small bipartite-ish edge set (customers 0-3 <-> merchants 4-7).
    x = jax.random.normal(keys[8], (NUM_NODES, IN_CHANNELS), jnp.float32)
    edge_index = jnp.array(
        [[0, 1, 2, 3, 4, 5, 6, 7, 0, 1],
         [4, 5, 6, 7, 0, 1, 2, 3, 5, 6]], dtype=jnp.int32)

    # Customer-merchant pairs fixture.
    pairs = jnp.array([[0, 4], [1, 5], [2, 6]], dtype=jnp.int32)

    out = graphsage_recommender_forward(params, x, edge_index, pairs)
    out = jax.block_until_ready(out)

    ref = reference_forward(params, x, edge_index, pairs)
    assert out.shape == (3,), out.shape
    assert jnp.allclose(out, ref, atol=1e-5, rtol=1e-5), (out, ref)

    # Optional bf16 compute path (halves HBM traffic for A/X/W; f32 accumulate).
    out_bf16 = graphsage_recommender_forward(params, x, edge_index, pairs,
                                             compute_dtype=jnp.bfloat16)
    out_bf16 = jax.block_until_ready(out_bf16)
    assert jnp.allclose(out_bf16, ref, atol=2e-2, rtol=2e-2), (out_bf16, ref)

    print("KERNEL_OK")
</pallas_src>

<mosaic_0001>
module attributes {stable_mosaic.version = 11 : i64} {
  func.func @_fused_graphsage_kernel(%arg0: i32, %arg1: i32, %arg2: memref<8x8xf32, #tpu.memory_space<vmem>>, %arg3: memref<8x128xf32, #tpu.memory_space<vmem>>, %arg4: memref<2x128xi32, #tpu.memory_space<vmem>>, %arg5: memref<128x128xf32, #tpu.memory_space<vmem>>, %arg6: memref<128x128xf32, #tpu.memory_space<vmem>>, %arg7: memref<1x128xf32, #tpu.memory_space<vmem>>, %arg8: memref<128x128xf32, #tpu.memory_space<vmem>>, %arg9: memref<128x128xf32, #tpu.memory_space<vmem>>, %arg10: memref<1x128xf32, #tpu.memory_space<vmem>>, %arg11: memref<128x1xf32, #tpu.memory_space<vmem>>, %arg12: memref<128x1xf32, #tpu.memory_space<vmem>>, %arg13: memref<1x1xf32, #tpu.memory_space<vmem>>, %arg14: memref<1x128xf32, #tpu.memory_space<vmem>>, %arg15: memref<8x128xf32, #tpu.memory_space<vmem>>, %arg16: memref<8x128xf32, #tpu.memory_space<vmem>>, %arg17: memref<8x128xf32, #tpu.memory_space<vmem>>) attributes {dimension_semantics = [#tpu.dimension_semantics<arbitrary>, #tpu.dimension_semantics<arbitrary>], iteration_bounds = array<i64: 2, 1>, scalar_prefetch = 0 : i64, scratch_operands = 3 : i64, tpu.core_type = #tpu.core_type<tc>, window_params = [{transform_indices = @transform_0, window_bounds = array<i64: 8, 8>}, {pipeline_mode = #tpu.pipeline_mode<synchronous>, transform_indices = @transform_1, window_bounds = array<i64: 8, 128>}, {pipeline_mode = #tpu.pipeline_mode<synchronous>, transform_indices = @transform_2, window_bounds = array<i64: 2, 128>}, {pipeline_mode = #tpu.pipeline_mode<synchronous>, transform_indices = @transform_3, window_bounds = array<i64: 128, 128>}, {pipeline_mode = #tpu.pipeline_mode<synchronous>, transform_indices = @transform_4, window_bounds = array<i64: 128, 128>}, {pipeline_mode = #tpu.pipeline_mode<synchronous>, transform_indices = @transform_5, window_bounds = array<i64: 1, 128>}, {pipeline_mode = #tpu.pipeline_mode<synchronous>, transform_indices = @transform_6, window_bounds = array<i64: 128, 128>}, {pipeline_mode = #tpu.pipeline_mode<synchronous>, transform_indices = @transform_7, window_bounds = array<i64: 128, 128>}, {pipeline_mode = #tpu.pipeline_mode<synchronous>, transform_indices = @transform_8, window_bounds = array<i64: 1, 128>}, {pipeline_mode = #tpu.pipeline_mode<synchronous>, transform_indices = @transform_9, window_bounds = array<i64: 128, 1>}, {pipeline_mode = #tpu.pipeline_mode<synchronous>, transform_indices = @transform_10, window_bounds = array<i64: 128, 1>}, {pipeline_mode = #tpu.pipeline_mode<synchronous>, transform_indices = @transform_11, window_bounds = array<i64: 1, 1>}, {pipeline_mode = #tpu.pipeline_mode<synchronous>, transform_indices = @transform_12, window_bounds = array<i64: 1, 128>}]} {
    %c0_i32 = arith.constant 0 : i32
    %0 = arith.cmpi eq, %arg1, %c0_i32 : i32
    %c0_i32_0 = arith.constant 0 : i32
    %1 = arith.cmpi eq, %arg0, %c0_i32_0 : i32
    %2 = arith.andi %0, %1 : i1
    %3 = arith.extui %2 : i1 to i32
    %c0_i32_1 = arith.constant 0 : i32
    %4 = arith.cmpi ne, %3, %c0_i32_1 : i32
    scf.if %4 {
      %cst_16 = arith.constant 0.000000e+00 : f32
      %29 = vector.broadcast %cst_16 : f32 to vector<8x128xf32>
      %c0_17 = arith.constant 0 : index
      %c0_18 = arith.constant 0 : index
      %30 = vector.load %arg15[%c0_17, %c0_18] : memref<8x128xf32, #tpu.memory_space<vmem>>, vector<8x128xf32>
      tpu.vector_store %arg15[%c0_17, %c0_18], %29 {strides = array<i32>} : memref<8x128xf32, #tpu.memory_space<vmem>>, vector<8x128xf32>,
      %c0_19 = arith.constant 0 : index
      %c0_20 = arith.constant 0 : index
      %31 = vector.load %arg3[%c0_19, %c0_20] : memref<8x128xf32, #tpu.memory_space<vmem>>, vector<8x128xf32>
      %c0_21 = arith.constant 0 : index
      %c0_22 = arith.constant 0 : index
      %32 = vector.load %arg5[%c0_21, %c0_22] : memref<128x128xf32, #tpu.memory_space<vmem>>, vector<128x128xf32>
      %cst_23 = arith.constant dense<0.000000e+00> : vector<8x128xf32>
      %33 = tpu.matmul %31, %32, %cst_23 {dimension_numbers = #tpu.dot_dimension_numbers<[1], [0], [0], [1], [0, 0, 1, 1], [], []>} : vector<8x128xf32>, vector<128x128xf32>, vector<8x128xf32> -> vector<8x128xf32>
      %c0_24 = arith.constant 0 : index
      %c0_25 = arith.constant 0 : index
      %34 = vector.load %arg16[%c0_24, %c0_25] : memref<8x128xf32, #tpu.memory_space<vmem>>, vector<8x128xf32>
      tpu.vector_store %arg16[%c0_24, %c0_25], %33 {strides = array<i32>} : memref<8x128xf32, #tpu.memory_space<vmem>>, vector<8x128xf32>,
    } else {
    }
    %c0_i32_2 = arith.constant 0 : i32
    %5 = arith.cmpi eq, %arg1, %c0_i32_2 : i32
    %c1_i32 = arith.constant 1 : i32
    %6 = arith.cmpi eq, %arg0, %c1_i32 : i32
    %7 = arith.andi %5, %6 : i1
    %8 = arith.extui %7 : i1 to i32
    %c0_i32_3 = arith.constant 0 : i32
    %9 = arith.cmpi ne, %8, %c0_i32_3 : i32
    scf.if %9 {
      %cst_16 = arith.constant 0.000000e+00 : f32
      %29 = vector.broadcast %cst_16 : f32 to vector<8x128xf32>
      %c0_17 = arith.constant 0 : index
      %c0_18 = arith.constant 0 : index
      %30 = vector.load %arg15[%c0_17, %c0_18] : memref<8x128xf32, #tpu.memory_space<vmem>>, vector<8x128xf32>
      tpu.vector_store %arg15[%c0_17, %c0_18], %29 {strides = array<i32>} : memref<8x128xf32, #tpu.memory_space<vmem>>, vector<8x128xf32>,
      %c0_19 = arith.constant 0 : index
      %c0_20 = arith.constant 0 : index
      %31 = vector.load %arg17[%c0_19, %c0_20] : memref<8x128xf32, #tpu.memory_space<vmem>>, vector<8x128xf32>
      %c0_21 = arith.constant 0 : index
      %c0_22 = arith.constant 0 : index
      %32 = vector.load %arg8[%c0_21, %c0_22] : memref<128x128xf32, #tpu.memory_space<vmem>>, vector<128x128xf32>
      %cst_23 = arith.constant dense<0.000000e+00> : vector<8x128xf32>
      %33 = tpu.matmul %31, %32, %cst_23 {dimension_numbers = #tpu.dot_dimension_numbers<[1], [0], [0], [1], [0, 0, 1, 1], [], []>} : vector<8x128xf32>, vector<128x128xf32>, vector<8x128xf32> -> vector<8x128xf32>
      %c0_24 = arith.constant 0 : index
      %c0_25 = arith.constant 0 : index
      %34 = vector.load %arg16[%c0_24, %c0_25] : memref<8x128xf32, #tpu.memory_space<vmem>>, vector<8x128xf32>
      tpu.vector_store %arg16[%c0_24, %c0_25], %33 {strides = array<i32>} : memref<8x128xf32, #tpu.memory_space<vmem>>, vector<8x128xf32>,
    } else {
    }
    %c8_i32 = arith.constant 8 : i32
    %10 = arith.muli %arg1, %c8_i32 : i32
    %11 = tpu.assume_multiple %10, 8 : i32
    %c0 = arith.constant 0 : index
    %c0_4 = arith.constant 0 : index
    %12 = vector.load %arg15[%c0, %c0_4] : memref<8x128xf32, #tpu.memory_space<vmem>>, vector<8x128xf32>
    %c0_5 = arith.constant 0 : index
    %c0_6 = arith.constant 0 : index
    %13 = vector.load %arg2[%c0_5, %c0_6] : memref<8x8xf32, #tpu.memory_space<vmem>>, vector<8x8xf32>
    %14 = arith.index_cast %11 : i32 to index
    %c0_7 = arith.constant 0 : index
    %15 = vector.load %arg16[%14, %c0_7] : memref<8x128xf32, #tpu.memory_space<vmem>>, vector<8x128xf32>
    %cst = arith.constant dense<0.000000e+00> : vector<8x128xf32>
    %16 = tpu.matmul %13, %15, %cst {dimension_numbers = #tpu.dot_dimension_numbers<[1], [0], [0], [1], [0, 0, 1, 1], [], []>} : vector<8x8xf32>, vector<8x128xf32>, vector<8x128xf32> -> vector<8x128xf32>
    %17 = arith.addf %12, %16 : vector<8x128xf32>
    %c0_8 = arith.constant 0 : index
    %c0_9 = arith.constant 0 : index
    %18 = vector.load %arg15[%c0_8, %c0_9] : memref<8x128xf32, #tpu.memory_space<vmem>>, vector<8x128xf32>
    tpu.vector_store %arg15[%c0_8, %c0_9], %17 {strides = array<i32>} : memref<8x128xf32, #tpu.memory_space<vmem>>, vector<8x128xf32>,
    %c0_i32_10 = arith.constant 0 : i32
    %19 = arith.cmpi eq, %arg1, %c0_i32_10 : i32
    %c0_i32_11 = arith.constant 0 : i32
    %20 = arith.cmpi eq, %arg0, %c0_i32_11 : i32
    %21 = arith.andi %19, %20 : i1
    %22 = arith.extui %21 : i1 to i32
    %c0_i32_12 = arith.constant 0 : i32
    %23 = arith.cmpi ne, %22, %c0_i32_12 : i32
    scf.if %23 {
      %c0_16 = arith.constant 0 : index
      %c0_17 = arith.constant 0 : index
      %29 = vector.load %arg15[%c0_16, %c0_17] : memref<8x128xf32, #tpu.memory_space<vmem>>, vector<8x128xf32>
      %c0_18 = arith.constant 0 : index
      %c0_19 = arith.constant 0 : index
      %30 = vector.load %arg3[%c0_18, %c0_19] : memref<8x128xf32, #tpu.memory_space<vmem>>, vector<8x128xf32>
      %c0_20 = arith.constant 0 : index
      %c0_21 = arith.constant 0 : index
      %31 = vector.load %arg6[%c0_20, %c0_21] : memref<128x128xf32, #tpu.memory_space<vmem>>, vector<128x128xf32>
      %cst_22 = arith.constant dense<0.000000e+00> : vector<8x128xf32>
      %32 = tpu.matmul %30, %31, %cst_22 {dimension_numbers = #tpu.dot_dimension_numbers<[1], [0], [0], [1], [0, 0, 1, 1], [], []>} : vector<8x128xf32>, vector<128x128xf32>, vector<8x128xf32> -> vector<8x128xf32>
      %33 = arith.addf %29, %32 : vector<8x128xf32>
      %c0_23 = arith.constant 0 : index
      %c0_24 = arith.constant 0 : index
      %34 = vector.load %arg7[%c0_23, %c0_24] : memref<1x128xf32, #tpu.memory_space<vmem>>, vector<1x128xf32>
      %35 = vector.broadcast %34 : vector<1x128xf32> to vector<8x128xf32>
      %36 = arith.addf %33, %35 : vector<8x128xf32>
      %cst_25 = arith.constant 0.000000e+00 : f32
      %37 = vector.broadcast %cst_25 : f32 to vector<8x128xf32>
      %38 = arith.maximumf %36, %37 : vector<8x128xf32>
      %c0_26 = arith.constant 0 : index
      %c0_27 = arith.constant 0 : index
      %39 = vector.load %arg17[%c0_26, %c0_27] : memref<8x128xf32, #tpu.memory_space<vmem>>, vector<8x128xf32>
      tpu.vector_store %arg17[%c0_26, %c0_27], %38 {strides = array<i32>} : memref<8x128xf32, #tpu.memory_space<vmem>>, vector<8x128xf32>,
    } else {
    }
    %c0_i32_13 = arith.constant 0 : i32
    %24 = arith.cmpi eq, %arg1, %c0_i32_13 : i32
    %c1_i32_14 = arith.constant 1 : i32
    %25 = arith.cmpi eq, %arg0, %c1_i32_14 : i32
    %26 = arith.andi %24, %25 : i1
    %27 = arith.extui %26 : i1 to i32
    %c0_i32_15 = arith.constant 0 : i32
    %28 = arith.cmpi ne, %27, %c0_i32_15 : i32
    scf.if %28 {
      %c0_16 = arith.constant 0 : index
      %c0_17 = arith.constant 0 : index
      %29 = vector.load %arg15[%c0_16, %c0_17] : memref<8x128xf32, #tpu.memory_space<vmem>>, vector<8x128xf32>
      %c0_18 = arith.constant 0 : index
      %c0_19 = arith.constant 0 : index
      %30 = vector.load %arg17[%c0_18, %c0_19] : memref<8x128xf32, #tpu.memory_space<vmem>>, vector<8x128xf32>
      %c0_20 = arith.constant 0 : index
      %c0_21 = arith.constant 0 : index
      %31 = vector.load %arg9[%c0_20, %c0_21] : memref<128x128xf32, #tpu.memory_space<vmem>>, vector<128x128xf32>
      %cst_22 = arith.constant dense<0.000000e+00> : vector<8x128xf32>
      %32 = tpu.matmul %30, %31, %cst_22 {dimension_numbers = #tpu.dot_dimension_numbers<[1], [0], [0], [1], [0, 0, 1, 1], [], []>} : vector<8x128xf32>, vector<128x128xf32>, vector<8x128xf32> -> vector<8x128xf32>
      %33 = arith.addf %29, %32 : vector<8x128xf32>
      %c0_23 = arith.constant 0 : index
      %c0_24 = arith.constant 0 : index
      %34 = vector.load %arg10[%c0_23, %c0_24] : memref<1x128xf32, #tpu.memory_space<vmem>>, vector<1x128xf32>
      %35 = vector.broadcast %34 : vector<1x128xf32> to vector<8x128xf32>
      %36 = arith.addf %33, %35 : vector<8x128xf32>
      %c0_25 = arith.constant 0 : index
      %c0_26 = arith.constant 0 : index
      %37 = vector.load %arg11[%c0_25, %c0_26] : memref<128x1xf32, #tpu.memory_space<vmem>>, vector<128x1xf32>
      %cst_27 = arith.constant dense<0.000000e+00> : vector<8x1xf32>
      %38 = tpu.matmul %36, %37, %cst_27 {dimension_numbers = #tpu.dot_dimension_numbers<[1], [0], [0], [1], [0, 0, 1, 1], [], []>} : vector<8x128xf32>, vector<128x1xf32>, vector<8x1xf32> -> vector<8x1xf32>
      %c0_28 = arith.constant 0 : index
      %c0_29 = arith.constant 0 : index
      %39 = vector.load %arg12[%c0_28, %c0_29] : memref<128x1xf32, #tpu.memory_space<vmem>>, vector<128x1xf32>
      %cst_30 = arith.constant dense<0.000000e+00> : vector<8x1xf32>
      %40 = tpu.matmul %36, %39, %cst_30 {dimension_numbers = #tpu.dot_dimension_numbers<[1], [0], [0], [1], [0, 0, 1, 1], [], []>} : vector<8x128xf32>, vector<128x1xf32>, vector<8x1xf32> -> vector<8x1xf32>
      %41 = tpu.iota {dimensions = array<i32: 0>} : vector<8x128xi32>
      %c0_31 = arith.constant 0 : index
      %c0_32 = arith.constant 0 : index
      %42 = vector.load %arg4[%c0_31, %c0_32] : memref<2x128xi32, #tpu.memory_space<vmem>>, vector<1x128xi32>
      %43 = vector.broadcast %42 : vector<1x128xi32> to vector<8x128xi32>
      %44 = arith.cmpi eq, %41, %43 : vector<8x128xi32>
      %45 = arith.extui %44 : vector<8x128xi1> to vector<8x128xi32>
      %46 = arith.sitofp %45 : vector<8x128xi32> to vector<8x128xf32>
      %c1 = arith.constant 1 : index
      %c0_33 = arith.constant 0 : index
      %47 = vector.load %arg4[%c1, %c0_33] : memref<2x128xi32, #tpu.memory_space<vmem>>, vector<1x128xi32>
      %48 = vector.broadcast %47 : vector<1x128xi32> to vector<8x128xi32>
      %49 = arith.cmpi eq, %41, %48 : vector<8x128xi32>
      %50 = arith.extui %49 : vector<8x128xi1> to vector<8x128xi32>
      %51 = arith.sitofp %50 : vector<8x128xi32> to vector<8x128xf32>
      %52 = vector.broadcast %38 : vector<8x1xf32> to vector<8x128xf32>
      %53 = arith.mulf %46, %52 : vector<8x128xf32>
      %54 = vector.broadcast %40 : vector<8x1xf32> to vector<8x128xf32>
      %55 = arith.mulf %51, %54 : vector<8x128xf32>
      %56 = arith.addf %53, %55 : vector<8x128xf32>
      %cst_34 = arith.constant dense<0.000000e+00> : vector<128xf32>
      %57 = vector.multi_reduction <add>, %56, %cst_34 [0] : vector<8x128xf32> to vector<128xf32>
      %58 = vector.shape_cast %57 : vector<128xf32> to vector<1x128xf32>
      %c0_35 = arith.constant 0 : index
      %c0_36 = arith.constant 0 : index
      %59 = vector.load %arg13[%c0_35, %c0_36] : memref<1x1xf32, #tpu.memory_space<vmem>>, vector<1x1xf32>
      %60 = vector.broadcast %59 : vector<1x1xf32> to vector<1x128xf32>
      %61 = arith.addf %58, %60 : vector<1x128xf32>
      %cst_37 = arith.constant 0.000000e+00 : f32
      %62 = vector.broadcast %cst_37 : f32 to vector<1x128xf32>
      %63 = arith.subf %62, %61 : vector<1x128xf32>
      %64 = math.exp %63 : vector<1x128xf32>
      %cst_38 = arith.constant 1.000000e+00 : f32
      %65 = vector.broadcast %cst_38 : f32 to vector<1x128xf32>
      %66 = arith.addf %65, %64 : vector<1x128xf32>
      %cst_39 = arith.constant 1.000000e+00 : f32
      %67 = vector.broadcast %cst_39 : f32 to vector<1x128xf32>
      %68 = arith.divf %67, %66 : vector<1x128xf32>
      %c0_40 = arith.constant 0 : index
      %c0_41 = arith.constant 0 : index
      %69 = vector.load %arg14[%c0_40, %c0_41] : memref<1x128xf32, #tpu.memory_space<vmem>>, vector<1x128xf32>
      tpu.vector_store %arg14[%c0_40, %c0_41], %68 {strides = array<i32>} : memref<1x128xf32, #tpu.memory_space<vmem>>, vector<1x128xf32>,
    } else {
    }
    return
  }
  func.func @transform_0(%arg0: i32, %arg1: i32) -> (i32, i32) {
    %c0_i32 = arith.constant 0 : i32
    %c0_i32_0 = arith.constant 0 : i32
    return %c0_i32, %arg1 : i32, i32
  }
  func.func @transform_1(%arg0: i32, %arg1: i32) -> (i32, i32) {
    %c0_i32 = arith.constant 0 : i32
    %c0_i32_0 = arith.constant 0 : i32
    %c0_i32_1 = arith.constant 0 : i32
    return %c0_i32, %c0_i32_0 : i32, i32
  }
  func.func @transform_2(%arg0: i32, %arg1: i32) -> (i32, i32) {
    %c0_i32 = arith.constant 0 : i32
    %c0_i32_0 = arith.constant 0 : i32
    %c0_i32_1 = arith.constant 0 : i32
    return %c0_i32, %c0_i32_0 : i32, i32
  }
  func.func @transform_3(%arg0: i32, %arg1: i32) -> (i32, i32) {
    %c0_i32 = arith.constant 0 : i32
    %c0_i32_0 = arith.constant 0 : i32
    %c0_i32_1 = arith.constant 0 : i32
    return %c0_i32, %c0_i32_0 : i32, i32
  }
  func.func @transform_4(%arg0: i32, %arg1: i32) -> (i32, i32) {
    %c0_i32 = arith.constant 0 : i32
    %c0_i32_0 = arith.constant 0 : i32
    %c0_i32_1 = arith.constant 0 : i32
    return %c0_i32, %c0_i32_0 : i32, i32
  }
  func.func @transform_5(%arg0: i32, %arg1: i32) -> (i32, i32) {
    %c0_i32 = arith.constant 0 : i32
    %c0_i32_0 = arith.constant 0 : i32
    %c0_i32_1 = arith.constant 0 : i32
    return %c0_i32, %c0_i32_0 : i32, i32
  }
  func.func @transform_6(%arg0: i32, %arg1: i32) -> (i32, i32) {
    %c0_i32 = arith.constant 0 : i32
    %c0_i32_0 = arith.constant 0 : i32
    %c0_i32_1 = arith.constant 0 : i32
    return %c0_i32, %c0_i32_0 : i32, i32
  }
  func.func @transform_7(%arg0: i32, %arg1: i32) -> (i32, i32) {
    %c0_i32 = arith.constant 0 : i32
    %c0_i32_0 = arith.constant 0 : i32
    %c0_i32_1 = arith.constant 0 : i32
    return %c0_i32, %c0_i32_0 : i32, i32
  }
  func.func @transform_8(%arg0: i32, %arg1: i32) -> (i32, i32) {
    %c0_i32 = arith.constant 0 : i32
    %c0_i32_0 = arith.constant 0 : i32
    %c0_i32_1 = arith.constant 0 : i32
    return %c0_i32, %c0_i32_0 : i32, i32
  }
  func.func @transform_9(%arg0: i32, %arg1: i32) -> (i32, i32) {
    %c0_i32 = arith.constant 0 : i32
    %c0_i32_0 = arith.constant 0 : i32
    %c0_i32_1 = arith.constant 0 : i32
    return %c0_i32, %c0_i32_0 : i32, i32
  }
  func.func @transform_10(%arg0: i32, %arg1: i32) -> (i32, i32) {
    %c0_i32 = arith.constant 0 : i32
    %c0_i32_0 = arith.constant 0 : i32
    %c0_i32_1 = arith.constant 0 : i32
    return %c0_i32, %c0_i32_0 : i32, i32
  }
  func.func @transform_11(%arg0: i32, %arg1: i32) -> (i32, i32) {
    %c0_i32 = arith.constant 0 : i32
    %c0_i32_0 = arith.constant 0 : i32
    %c0_i32_1 = arith.constant 0 : i32
    return %c0_i32, %c0_i32_0 : i32, i32
  }
  func.func @transform_12(%arg0: i32, %arg1: i32) -> (i32, i32) {
    %c0_i32 = arith.constant 0 : i32
    %c0_i32_0 = arith.constant 0 : i32
    %c0_i32_1 = arith.constant 0 : i32
    return %c0_i32, %c0_i32_0 : i32, i32
  }
}

</mosaic_0001>

<llo_original>
// kernel: tpu_custom_call.1
$region0: #{tpu_custom_call.1}
  #allocation0 [shape = 'u32[]', space=smem, size = 0x4, offset = 0x4, fixed_abs, tag = 'smem constant byte address 0x4 - core index']
  #allocation1 [shape = 'u32[144,128]{1,0:T(1,128)}', space=vmem, size = 0x12000, scoped, tag = 'internal scratch']
  #allocation2 [shape = 'f32[8,128]{1,0:T(8,128)}', space=vmem, size = 0x1000, scoped, tag = 'scratch operand']
  #allocation3 [shape = 'f32[8,128]{1,0:T(8,128)}', space=vmem, size = 0x1000, scoped, tag = 'scratch operand']
  #allocation4 [shape = 'f32[8,128]{1,0:T(8,128)}', space=vmem, size = 0x1000, scoped, tag = 'scratch operand']
  #allocation5 [shape = 'f32[1,1]{1,0:T(1,128)S(1)}', space=vmem, size = 0x200, scoped, tag = 'scoped memory for tpu_custom_call.1']
  %s0 = inlined_call_operand.hbm [shape: f32[8,8], index: 0, kind: input, shape index: {}]
  %s1 = inlined_call_operand.vmem [shape: f32[8,128], index: 1, kind: input, shape index: {}]
  %s2 = inlined_call_operand.vmem [shape: s32[2,128], index: 2, kind: input, shape index: {}]
  %s3 = inlined_call_operand.vmem [shape: f32[128,128], index: 3, kind: input, shape index: {}]
  %s4 = inlined_call_operand.vmem [shape: f32[128,128], index: 4, kind: input, shape index: {}]
  %s5 = inlined_call_operand.vmem [shape: f32[1,128], index: 5, kind: input, shape index: {}]
  %s6 = inlined_call_operand.hbm [shape: f32[128,128], index: 6, kind: input, shape index: {}]
  %s7 = inlined_call_operand.hbm [shape: f32[128,128], index: 7, kind: input, shape index: {}]
  %s8 = inlined_call_operand.vmem [shape: f32[1,128], index: 8, kind: input, shape index: {}]
  %s9 = inlined_call_operand.vmem [shape: f32[128,1], index: 9, kind: input, shape index: {}]
  %s10 = inlined_call_operand.vmem [shape: f32[128,1], index: 10, kind: input, shape index: {}]
  %s11 = inlined_call_operand.<no memory space> [shape: f32[1,1], index: 11, kind: input, shape index: {}]
  %s12 = inlined_call_operand.hbm [shape: f32[1,128], index: 12, kind: output, shape index: {}]
  %s13 = sld [smem:[#allocation0]]
  $region109: #{tpu_custom_call.1} parent=0
    _
  %s15 = ssub.s32 1, %s13
  %s16 = scalar_select 0, %s15, %s13
  %v17 = vstv %s11
  %18 = vst [vmem:[#allocation5] sm:$0x1] %v17
  $region1: #{tpu_custom_call.1} parent=0
    #allocation6 [shape = 'u8[4096]{0}', space=vmem, size = 0x1000, scoped, tag = 'input window, operand 0, single buffered']
    #allocation7 [shape = 's32[2]{0}', space=sflag, size = 0x8, scoped, tag = 'scoped memory for tpu_custom_call.1']
    #allocation8 [shape = 's32[2]{0}', space=sflag, size = 0x8, scoped, tag = 'scoped memory for tpu_custom_call.1']
    #allocation9 [shape = 'u8[65536]{0}', space=vmem, size = 0x10000, scoped, tag = 'input window, operand 6, single buffered']
    #allocation10 [shape = 's32[1]{0}', space=sflag, size = 0x4, scoped, tag = 'scoped memory for tpu_custom_call.1']
    #allocation11 [shape = 'u8[65536]{0}', space=vmem, size = 0x10000, scoped, tag = 'input window, operand 7, single buffered']
    #allocation12 [shape = 'u8[512]{0}', space=vmem, size = 0x400, scoped, tag = 'output window, operand 0, single buffered']
    %19 = vsyncpa [#allocation7], 0
    %20 = vsyncpa [#allocation10], 0
    %21 = vsyncpa [#allocation8], 0
    loop: start=0, step=1, limit=4
    $region2: #{tpu_custom_call.1} parent=1 // loop_pre_header
      _
    $region3: #{tpu_custom_call.1} parent=1 // loop_header
      %s23 = sphi 0, %s27
      %p24 = scmp.ge.s32.totalorder %s23, 4
      %s30 = sphi 0, %s42
      %s31 = sphi 0, %s38
      %s32 = sphi 0, %s30
      %s33 = sphi 0, %s31
      %s34 = sphi 0, %s32
      %s35 = sphi 0, %s33
      %s45 = sphi 0, %s47
      %s48 = sphi 0, %s45
      %s49 = sphi 0, %s48
      %s65 = sphi 0, %s49
      %s69 = sphi 0, %s69
      %s71 = sphi 0, %s69
      %s72 = sphi 0, %s71
      %s86 = sphi 0, %s72
      %s90 = sphi 0, %s90
      %s92 = sphi 0, %s90
      %s93 = sphi 0, %s92
      %s107 = sphi 0, %s93
      %s111 = sphi 0, %s111
      %s113 = sphi 0, %s111
      %s114 = sphi 0, %s113
      %s128 = sphi 0, %s114
      %s132 = sphi 0, %s132
      %s134 = sphi 0, %s132
      %s135 = sphi 0, %s134
      %s149 = sphi 0, %s135
      %s153 = sphi 0, %s153
      %s155 = sphi 0, %s153
      %s156 = sphi 0, %s155
      %s170 = sphi 0, %s156
      %s174 = sphi 0, %s174
      %s176 = sphi 0, %s174
      %s177 = sphi 0, %s176
      %s191 = sphi 0, %s177
      %s195 = sphi 0, %s195
      %s197 = sphi 0, %s195
      %s198 = sphi 0, %s197
      %s212 = sphi 0, %s198
      %s216 = sphi 0, %s216
      %s218 = sphi 0, %s216
      %s219 = sphi 0, %s218
      %s233 = sphi 0, %s219
      %s237 = sphi 0, %s237
      %s239 = sphi 0, %s237
      %s240 = sphi 0, %s239
      %s254 = sphi 0, %s240
      %s258 = sphi 0, %s258
      %s260 = sphi 0, %s258
      %s261 = sphi 0, %s260
      %s275 = sphi 0, %s261
      %s279 = sphi 0, %s279
      %s281 = sphi 0, %s279
      %s282 = sphi 0, %s281
      %s296 = sphi 0, %s282
      %s300 = sphi 0, %s300
      %s302 = sphi 0, %s300
      %s303 = sphi 0, %s302
      %s317 = sphi 0, %s303
    $region4: #{tpu_custom_call.1} parent=1 // loop_header_branch
      %26 = sbr.rel (%p24) target = $region8
    $region5: #{tpu_custom_call.1} parent=1 // loop_body
      %s28 = ssub.s32 %s23, 1
      %s29 = ssub.s32 %s23, 2
      %s36 = sadd.s32 1, %s31
      %p37 = scmp.ge.s32.totalorder %s36, 1
      %s38 = scalar_select %p37, 0, %s36
      %s39 = sadd.s32 1, %s30
      %s40 = scalar_select %p37, %s39, %s30
      %p41 = scmp.ge.s32.totalorder %s40, 2
      %s42 = scalar_select %p41, 0, %s40
      %s43 = ssub.s32 %s31, %s38
      %p44 = scmp.eq.s32.totalorder %s43, 0
      %s46 = sadd.s32 %s45, 1
      %s47 = scalar_select %p44, %s45, %s46
      %p50 = pneg %p44
      %p51 = scmp.eq.s32.totalorder %s23, 1
      %p52 = por %p50, %p51
      %p53 = scmp.ne.s32.totalorder %s45, %s48
      %p54 = scmp.eq.s32.totalorder %s23, 0
      %p55 = por %p53, %p54
      %p56 = scmp.ne.s32.totalorder %s45, %s48
      %p57 = scmp.eq.s32.totalorder %s28, 1
      %p58 = por %p56, %p57
      %p59 = scmp.ne.s32.totalorder %s48, %s49
      %p60 = scmp.eq.s32.totalorder %s28, 0
      %p61 = por %p59, %p60
      %p62 = scmp.ne.s32.totalorder %s48, %s49
      %p63 = scmp.eq.s32.totalorder %s29, 1
      %p64 = por %p62, %p63
      %p66 = scmp.ne.s32.totalorder %s49, %s65
      %p67 = scmp.eq.s32.totalorder %s29, 0
      %p68 = por %p66, %p67
      %s70 = sadd.s32 %s69, 1
      %p73 = scmp.eq.s32.totalorder %s23, 1
      %p74 = scmp.ne.s32.totalorder %s69, %s71
      %p75 = scmp.eq.s32.totalorder %s23, 0
      %p76 = por %p74, %p75
      %p77 = scmp.ne.s32.totalorder %s69, %s71
      %p78 = scmp.eq.s32.totalorder %s28, 1
      %p79 = por %p77, %p78
      %p80 = scmp.ne.s32.totalorder %s71, %s72
      %p81 = scmp.eq.s32.totalorder %s28, 0
      %p82 = por %p80, %p81
      %p83 = scmp.ne.s32.totalorder %s71, %s72
      %p84 = scmp.eq.s32.totalorder %s29, 1
      %p85 = por %p83, %p84
      %p87 = scmp.ne.s32.totalorder %s72, %s86
      %p88 = scmp.eq.s32.totalorder %s29, 0
      %p89 = por %p87, %p88
      %s91 = sadd.s32 %s90, 1
      %p94 = scmp.eq.s32.totalorder %s23, 1
      %p95 = scmp.ne.s32.totalorder %s90, %s92
      %p96 = scmp.eq.s32.totalorder %s23, 0
      %p97 = por %p95, %p96
      %p98 = scmp.ne.s32.totalorder %s90, %s92
      %p99 = scmp.eq.s32.totalorder %s28, 1
      %p100 = por %p98, %p99
      %p101 = scmp.ne.s32.totalorder %s92, %s93
      %p102 = scmp.eq.s32.totalorder %s28, 0
      %p103 = por %p101, %p102
      %p104 = scmp.ne.s32.totalorder %s92, %s93
      %p105 = scmp.eq.s32.totalorder %s29, 1
      %p106 = por %p104, %p105
      %p108 = scmp.ne.s32.totalorder %s93, %s107
      %p109 = scmp.eq.s32.totalorder %s29, 0
      %p110 = por %p108, %p109
      %s112 = sadd.s32 %s111, 1
      %p115 = scmp.eq.s32.totalorder %s23, 1
      %p116 = scmp.ne.s32.totalorder %s111, %s113
      %p117 = scmp.eq.s32.totalorder %s23, 0
      %p118 = por %p116, %p117
      %p119 = scmp.ne.s32.totalorder %s111, %s113
      %p120 = scmp.eq.s32.totalorder %s28, 1
      %p121 = por %p119, %p120
      %p122 = scmp.ne.s32.totalorder %s113, %s114
      %p123 = scmp.eq.s32.totalorder %s28, 0
      %p124 = por %p122, %p123
      %p125 = scmp.ne.s32.totalorder %s113, %s114
      %p126 = scmp.eq.s32.totalorder %s29, 1
      %p127 = por %p125, %p126
      %p129 = scmp.ne.s32.totalorder %s114, %s128
      %p130 = scmp.eq.s32.totalorder %s29, 0
      %p131 = por %p129, %p130
      %s133 = sadd.s32 %s132, 1
      %p136 = scmp.eq.s32.totalorder %s23, 1
      %p137 = scmp.ne.s32.totalorder %s132, %s134
      %p138 = scmp.eq.s32.totalorder %s23, 0
      %p139 = por %p137, %p138
      %p140 = scmp.ne.s32.totalorder %s132, %s134
      %p141 = scmp.eq.s32.totalorder %s28, 1
      %p142 = por %p140, %p141
      %p143 = scmp.ne.s32.totalorder %s134, %s135
      %p144 = scmp.eq.s32.totalorder %s28, 0
      %p145 = por %p143, %p144
      %p146 = scmp.ne.s32.totalorder %s134, %s135
      %p147 = scmp.eq.s32.totalorder %s29, 1
      %p148 = por %p146, %p147
      %p150 = scmp.ne.s32.totalorder %s135, %s149
      %p151 = scmp.eq.s32.totalorder %s29, 0
      %p152 = por %p150, %p151
      %s154 = sadd.s32 %s153, 1
      %p157 = scmp.eq.s32.totalorder %s23, 1
      %p158 = scmp.ne.s32.totalorder %s153, %s155
      %p159 = scmp.eq.s32.totalorder %s23, 0
      %p160 = por %p158, %p159
      %p161 = scmp.ne.s32.totalorder %s153, %s155
      %p162 = scmp.eq.s32.totalorder %s28, 1
      %p163 = por %p161, %p162
      %p164 = scmp.ne.s32.totalorder %s155, %s156
      %p165 = scmp.eq.s32.totalorder %s28, 0
      %p166 = por %p164, %p165
      %p167 = scmp.ne.s32.totalorder %s155, %s156
      %p168 = scmp.eq.s32.totalorder %s29, 1
      %p169 = por %p167, %p168
      %p171 = scmp.ne.s32.totalorder %s156, %s170
      %p172 = scmp.eq.s32.totalorder %s29, 0
      %p173 = por %p171, %p172
      %s175 = sadd.s32 %s174, 1
      %p178 = scmp.eq.s32.totalorder %s23, 1
      %p179 = scmp.ne.s32.totalorder %s174, %s176
      %p180 = scmp.eq.s32.totalorder %s23, 0
      %p181 = por %p179, %p180
      %p182 = scmp.ne.s32.totalorder %s174, %s176
      %p183 = scmp.eq.s32.totalorder %s28, 1
      %p184 = por %p182, %p183
      %p185 = scmp.ne.s32.totalorder %s176, %s177
      %p186 = scmp.eq.s32.totalorder %s28, 0
      %p187 = por %p185, %p186
      %p188 = scmp.ne.s32.totalorder %s176, %s177
      %p189 = scmp.eq.s32.totalorder %s29, 1
      %p190 = por %p188, %p189
      %p192 = scmp.ne.s32.totalorder %s177, %s191
      %p193 = scmp.eq.s32.totalorder %s29, 0
      %p194 = por %p192, %p193
      %s196 = sadd.s32 %s195, 1
      %p199 = scmp.eq.s32.totalorder %s23, 1
      %p200 = scmp.ne.s32.totalorder %s195, %s197
      %p201 = scmp.eq.s32.totalorder %s23, 0
      %p202 = por %p200, %p201
      %p203 = scmp.ne.s32.totalorder %s195, %s197
      %p204 = scmp.eq.s32.totalorder %s28, 1
      %p205 = por %p203, %p204
      %p206 = scmp.ne.s32.totalorder %s197, %s198
      %p207 = scmp.eq.s32.totalorder %s28, 0
      %p208 = por %p206, %p207
      %p209 = scmp.ne.s32.totalorder %s197, %s198
      %p210 = scmp.eq.s32.totalorder %s29, 1
      %p211 = por %p209, %p210
      %p213 = scmp.ne.s32.totalorder %s198, %s212
      %p214 = scmp.eq.s32.totalorder %s29, 0
      %p215 = por %p213, %p214
      %s217 = sadd.s32 %s216, 1
      %p220 = scmp.eq.s32.totalorder %s23, 1
      %p221 = scmp.ne.s32.totalorder %s216, %s218
      %p222 = scmp.eq.s32.totalorder %s23, 0
      %p223 = por %p221, %p222
      %p224 = scmp.ne.s32.totalorder %s216, %s218
      %p225 = scmp.eq.s32.totalorder %s28, 1
      %p226 = por %p224, %p225
      %p227 = scmp.ne.s32.totalorder %s218, %s219
      %p228 = scmp.eq.s32.totalorder %s28, 0
      %p229 = por %p227, %p228
      %p230 = scmp.ne.s32.totalorder %s218, %s219
      %p231 = scmp.eq.s32.totalorder %s29, 1
      %p232 = por %p230, %p231
      %p234 = scmp.ne.s32.totalorder %s219, %s233
      %p235 = scmp.eq.s32.totalorder %s29, 0
      %p236 = por %p234, %p235
      %s238 = sadd.s32 %s237, 1
      %p241 = scmp.eq.s32.totalorder %s23, 1
      %p242 = scmp.ne.s32.totalorder %s237, %s239
      %p243 = scmp.eq.s32.totalorder %s23, 0
      %p244 = por %p242, %p243
      %p245 = scmp.ne.s32.totalorder %s237, %s239
      %p246 = scmp.eq.s32.totalorder %s28, 1
      %p247 = por %p245, %p246
      %p248 = scmp.ne.s32.totalorder %s239, %s240
      %p249 = scmp.eq.s32.totalorder %s28, 0
      %p250 = por %p248, %p249
      %p251 = scmp.ne.s32.totalorder %s239, %s240
      %p252 = scmp.eq.s32.totalorder %s29, 1
      %p253 = por %p251, %p252
      %p255 = scmp.ne.s32.totalorder %s240, %s254
      %p256 = scmp.eq.s32.totalorder %s29, 0
      %p257 = por %p255, %p256
      %s259 = sadd.s32 %s258, 1
      %p262 = scmp.eq.s32.totalorder %s23, 1
      %p263 = scmp.ne.s32.totalorder %s258, %s260
      %p264 = scmp.eq.s32.totalorder %s23, 0
      %p265 = por %p263, %p264
      %p266 = scmp.ne.s32.totalorder %s258, %s260
      %p267 = scmp.eq.s32.totalorder %s28, 1
      %p268 = por %p266, %p267
      %p269 = scmp.ne.s32.totalorder %s260, %s261
      %p270 = scmp.eq.s32.totalorder %s28, 0
      %p271 = por %p269, %p270
      %p272 = scmp.ne.s32.totalorder %s260, %s261
      %p273 = scmp.eq.s32.totalorder %s29, 1
      %p274 = por %p272, %p273
      %p276 = scmp.ne.s32.totalorder %s261, %s275
      %p277 = scmp.eq.s32.totalorder %s29, 0
      %p278 = por %p276, %p277
      %s280 = sadd.s32 %s279, 1
      %p283 = scmp.eq.s32.totalorder %s23, 1
      %p284 = scmp.ne.s32.totalorder %s279, %s281
      %p285 = scmp.eq.s32.totalorder %s23, 0
      %p286 = por %p284, %p285
      %p287 = scmp.ne.s32.totalorder %s279, %s281
      %p288 = scmp.eq.s32.totalorder %s28, 1
      %p289 = por %p287, %p288
      %p290 = scmp.ne.s32.totalorder %s281, %s282
      %p291 = scmp.eq.s32.totalorder %s28, 0
      %p292 = por %p290, %p291
      %p293 = scmp.ne.s32.totalorder %s281, %s282
      %p294 = scmp.eq.s32.totalorder %s29, 1
      %p295 = por %p293, %p294
      %p297 = scmp.ne.s32.totalorder %s282, %s296
      %p298 = scmp.eq.s32.totalorder %s29, 0
      %p299 = por %p297, %p298
      %s301 = sadd.s32 %s300, 1
      %p304 = scmp.eq.s32.totalorder %s23, 1
      %p305 = scmp.ne.s32.totalorder %s300, %s302
      %p306 = scmp.eq.s32.totalorder %s23, 0
      %p307 = por %p305, %p306
      %p308 = scmp.ne.s32.totalorder %s300, %s302
      %p309 = scmp.eq.s32.totalorder %s28, 1
      %p310 = por %p308, %p309
      %p311 = scmp.ne.s32.totalorder %s302, %s303
      %p312 = scmp.eq.s32.totalorder %s28, 0
      %p313 = por %p311, %p312
      %p314 = scmp.ne.s32.totalorder %s302, %s303
      %p315 = scmp.eq.s32.totalorder %s29, 1
      %p316 = por %p314, %p315
      %p318 = scmp.ne.s32.totalorder %s303, %s317
      %p319 = scmp.eq.s32.totalorder %s29, 0
      %p320 = por %p318, %p319
      %p321 = scmp.le.s32.totalorder 1, %s23
      %p322 = scmp.lt.s32.totalorder %s23, 3
      %p323 = pnand %p321, %p322
      %p324 = pneg %p323
      // Predicated region
      $region9: #{tpu_custom_call.1} parent=5 // pred_check
        _
      $region10: #{tpu_custom_call.1} parent=5 // pred_check_branch
        %326 = sbr.rel (%p323) target = $region12
      $region11: #{tpu_custom_call.1} parent=5 // pred_region
        %s327 = ssub.s32 %s23, 1
        // Predicated region
        $region13: #{tpu_custom_call.1} parent=11 // pred_check
          %p328 = pneg %p61
        $region14: #{tpu_custom_call.1} parent=11 // pred_check_branch
          %330 = sbr.rel (%p328) target = $region16
        $region15: #{tpu_custom_call.1} parent=11 // pred_region
          %s332 = ssub.s32 128, 128
          %333 = vsyncadd [#allocation7], %s332
          %s334 = smul.addr %s33, 128
          %s335 = scalar_lea.hbm %s0, %s334
          %s337 = sshll.u32 [#allocation6], 4
          %s338 = int_to_ptr.vmem [resolvable:$true] %s337
          %340 = dma.hbm_to_vmem [thread:$0]  %s335, 128, %s338, [#allocation7]
        $region16: #{tpu_custom_call.1} parent=11 // pred_fallthru
          _
        // Predicated region
        $region17: #{tpu_custom_call.1} parent=11 // pred_check
          %p341 = pneg %p82
        $region18: #{tpu_custom_call.1} parent=11 // pred_check_branch
          %343 = sbr.rel (%p341) target = $region20
        $region19: #{tpu_custom_call.1} parent=11 // pred_region
          _
        $region20: #{tpu_custom_call.1} parent=11 // pred_fallthru
          _
        // Predicated region
        $region21: #{tpu_custom_call.1} parent=11 // pred_check
          %p344 = pneg %p103
        $region22: #{tpu_custom_call.1} parent=11 // pred_check_branch
          %346 = sbr.rel (%p344) target = $region24
        $region23: #{tpu_custom_call.1} parent=11 // pred_region
          _
        $region24: #{tpu_custom_call.1} parent=11 // pred_fallthru
          _
        // Predicated region
        $region25: #{tpu_custom_call.1} parent=11 // pred_check
          %p347 = pneg %p124
        $region26: #{tpu_custom_call.1} parent=11 // pred_check_branch
          %349 = sbr.rel (%p347) target = $region28
        $region27: #{tpu_custom_call.1} parent=11 // pred_region
          _
        $region28: #{tpu_custom_call.1} parent=11 // pred_fallthru
          _
        // Predicated region
        $region29: #{tpu_custom_call.1} parent=11 // pred_check
          %p350 = pneg %p145
        $region30: #{tpu_custom_call.1} parent=11 // pred_check_branch
          %352 = sbr.rel (%p350) target = $region32
        $region31: #{tpu_custom_call.1} parent=11 // pred_region
          _
        $region32: #{tpu_custom_call.1} parent=11 // pred_fallthru
          _
        // Predicated region
        $region33: #{tpu_custom_call.1} parent=11 // pred_check
          %p353 = pneg %p166
        $region34: #{tpu_custom_call.1} parent=11 // pred_check_branch
          %355 = sbr.rel (%p353) target = $region36
        $region35: #{tpu_custom_call.1} parent=11 // pred_region
          _
        $region36: #{tpu_custom_call.1} parent=11 // pred_fallthru
          _
        // Predicated region
        $region37: #{tpu_custom_call.1} parent=11 // pred_check
          %p356 = pneg %p187
        $region38: #{tpu_custom_call.1} parent=11 // pred_check_branch
          %358 = sbr.rel (%p356) target = $region40
        $region39: #{tpu_custom_call.1} parent=11 // pred_region
          %s360 = ssub.s32 2048, 2048
          %361 = vsyncadd [#allocation10], %s360
          %s362 = sshll.u32 [#allocation9], 4
          %s363 = int_to_ptr.vmem [resolvable:$true] %s362
          %368 = dma.hbm_to_vmem [thread:$0]  %s6, 2048, %s363, [#allocation10], 128, 128, 8
        $region40: #{tpu_custom_call.1} parent=11 // pred_fallthru
          _
        // Predicated region
        $region41: #{tpu_custom_call.1} parent=11 // pred_check
          %p369 = pneg %p208
        $region42: #{tpu_custom_call.1} parent=11 // pred_check_branch
          %371 = sbr.rel (%p369) target = $region44
        $region43: #{tpu_custom_call.1} parent=11 // pred_region
          %s373 = ssub.s32 2048, 2048
          %374 = vsyncadd [#allocation10], %s373
          %s375 = sshll.u32 [#allocation11], 4
          %s376 = int_to_ptr.vmem [resolvable:$true] %s375
          %381 = dma.hbm_to_vmem [thread:$0]  %s7, 2048, %s376, [#allocation10], 128, 128, 8
        $region44: #{tpu_custom_call.1} parent=11 // pred_fallthru
          _
        // Predicated region
        $region45: #{tpu_custom_call.1} parent=11 // pred_check
          %p382 = pneg %p229
        $region46: #{tpu_custom_call.1} parent=11 // pred_check_branch
          %384 = sbr.rel (%p382) target = $region48
        $region47: #{tpu_custom_call.1} parent=11 // pred_region
          _
        $region48: #{tpu_custom_call.1} parent=11 // pred_fallthru
          _
        // Predicated region
        $region49: #{tpu_custom_call.1} parent=11 // pred_check
          %p385 = pneg %p250
        $region50: #{tpu_custom_call.1} parent=11 // pred_check_branch
          %387 = sbr.rel (%p385) target = $region52
        $region51: #{tpu_custom_call.1} parent=11 // pred_region
          _
        $region52: #{tpu_custom_call.1} parent=11 // pred_fallthru
          _
        // Predicated region
        $region53: #{tpu_custom_call.1} parent=11 // pred_check
          %p388 = pneg %p271
        $region54: #{tpu_custom_call.1} parent=11 // pred_check_branch
          %390 = sbr.rel (%p388) target = $region56
        $region55: #{tpu_custom_call.1} parent=11 // pred_region
          _
        $region56: #{tpu_custom_call.1} parent=11 // pred_fallthru
          _
        // Predicated region
        $region57: #{tpu_custom_call.1} parent=11 // pred_check
          %p391 = pneg %p292
        $region58: #{tpu_custom_call.1} parent=11 // pred_check_branch
          %393 = sbr.rel (%p391) target = $region60
        $region59: #{tpu_custom_call.1} parent=11 // pred_region
          _
        $region60: #{tpu_custom_call.1} parent=11 // pred_fallthru
          _
      $region12: #{tpu_custom_call.1} parent=5 // pred_fallthru
        _
      %p394 = scmp.lt.s32.totalorder %s23, 2
      // Predicated region
      $region61: #{tpu_custom_call.1} parent=5 // pred_check
        %p395 = pneg %p394
      $region62: #{tpu_custom_call.1} parent=5 // pred_check_branch
        %397 = sbr.rel (%p395) target = $region64
      $region63: #{tpu_custom_call.1} parent=5 // pred_region
        _
      $region64: #{tpu_custom_call.1} parent=5 // pred_fallthru
        _
      %p398 = scmp.le.s32.totalorder 1, %s23
      %p399 = scmp.lt.s32.totalorder %s23, 3
      %p400 = pnand %p398, %p399
      %p401 = pneg %p400
      // Predicated region
      $region65: #{tpu_custom_call.1} parent=5 // pred_check
        _
      $region66: #{tpu_custom_call.1} parent=5 // pred_check_branch
        %403 = sbr.rel (%p400) target = $region68
      $region67: #{tpu_custom_call.1} parent=5 // pred_region
        %s404 = ssub.s32 %s23, 1
        // Predicated region
        $region69: #{tpu_custom_call.1} parent=67 // pred_check
          %p405 = pneg %p61
        $region70: #{tpu_custom_call.1} parent=67 // pred_check_branch
          %407 = sbr.rel (%p405) target = $region72
        $region71: #{tpu_custom_call.1} parent=67 // pred_region
          %408 = dma.done [#allocation7], 128
        $region72: #{tpu_custom_call.1} parent=67 // pred_fallthru
          _
        // Predicated region
        $region73: #{tpu_custom_call.1} parent=67 // pred_check
          %p409 = pneg %p187
        $region74: #{tpu_custom_call.1} parent=67 // pred_check_branch
          %411 = sbr.rel (%p409) target = $region76
        $region75: #{tpu_custom_call.1} parent=67 // pred_region
          %412 = dma.done [#allocation10], 2048
        $region76: #{tpu_custom_call.1} parent=67 // pred_fallthru
          _
        // Predicated region
        $region77: #{tpu_custom_call.1} parent=67 // pred_check
          %p413 = pneg %p208
        $region78: #{tpu_custom_call.1} parent=67 // pred_check_branch
          %415 = sbr.rel (%p413) target = $region80
        $region79: #{tpu_custom_call.1} parent=67 // pred_region
          %416 = dma.done [#allocation10], 2048
        $region80: #{tpu_custom_call.1} parent=67 // pred_fallthru
          _
        %p417 = pneg %p61
        %p418 = pneg %p58
        %p419 = pneg %p82
        %p420 = pneg %p79
        %p421 = pneg %p103
        %p422 = pneg %p100
        %p423 = pneg %p124
        %p424 = pneg %p121
        %p425 = pneg %p145
        %p426 = pneg %p142
        %p427 = pneg %p166
        %p428 = pneg %p163
        %p429 = pneg %p187
        %p430 = pneg %p184
        %p431 = pneg %p208
        %p432 = pneg %p205
        %p433 = pneg %p229
        %p434 = pneg %p226
        %p435 = pneg %p250
        %p436 = pneg %p247
        %p437 = pneg %p271
        %p438 = pneg %p268
        %p439 = pneg %p292
        %p440 = pneg %p289
        %p441 = pneg %p313
        %p442 = pneg %p310
        %p443 = scmp.eq.s32.totalorder %s33, 0
        %p444 = scmp.eq.s32.totalorder %s32, 0
        %p445 = pnand %p443, %p444
        %p446 = pneg %p445
        // Predicated region
        $region81: #{tpu_custom_call.1} parent=67 // pred_check
          _
        $region82: #{tpu_custom_call.1} parent=67 // pred_check_branch
          %448 = sbr.rel (%p445) target = $region84
        $region83: #{tpu_custom_call.1} parent=67 // pred_region
          %449 = vst [vmem:[#allocation2] sm:$0xff] 0.0
          %v450 = vld [vmem:[%s1] sm:$0xff]
          %v451 = vld [vmem:[%s3] sm:$0xff]
          %v452 = vld [vmem:[%s3 + $0x8] sm:$0xff]
          %v453 = vld [vmem:[%s3 + $0x10] sm:$0xff]
          %v454 = vld [vmem:[%s3 + $0x18] sm:$0xff]
          %v455 = vld [vmem:[%s3 + $0x20] sm:$0xff]
          %v456 = vld [vmem:[%s3 + $0x28] sm:$0xff]
          %v457 = vld [vmem:[%s3 + $0x30] sm:$0xff]
          %v458 = vld [vmem:[%s3 + $0x38] sm:$0xff]
          %v459 = vld [vmem:[%s3 + $0x40] sm:$0xff]
          %v460 = vld [vmem:[%s3 + $0x48] sm:$0xff]
          %v461 = vld [vmem:[%s3 + $0x50] sm:$0xff]
          %v462 = vld [vmem:[%s3 + $0x58] sm:$0xff]
          %v463 = vld [vmem:[%s3 + $0x60] sm:$0xff]
          %v464 = vld [vmem:[%s3 + $0x68] sm:$0xff]
          %v465 = vld [vmem:[%s3 + $0x70] sm:$0xff]
          %v466 = vld [vmem:[%s3 + $0x78] sm:$0xff]
          %467 = vmatprep.subr.mxu0 0.0
          %468 = vmatpush1.msra.mxu0 %v451
          %469 = vmatprep.subr.mxu0 0.0
          %470 = vmatpush1.msra.mxu0 %v452
          %471 = vmatprep.subr.mxu0 0.0
          %472 = vmatpush1.msra.mxu0 %v453
          %473 = vmatprep.subr.mxu0 0.0
          %474 = vmatpush1.msra.mxu0 %v454
          %475 = vmatprep.subr.mxu0 0.0
          %476 = vmatpush1.msra.mxu0 %v455
          %477 = vmatprep.subr.mxu0 0.0
          %478 = vmatpush1.msra.mxu0 %v456
          %479 = vmatprep.subr.mxu0 0.0
          %480 = vmatpush1.msra.mxu0 %v457
          %481 = vmatprep.subr.mxu0 0.0
          %482 = vmatpush1.msra.mxu0 %v458
          %483 = vmatprep.subr.mxu0 0.0
          %484 = vmatpush1.msra.mxu0 %v459
          %485 = vmatprep.subr.mxu0 0.0
          %486 = vmatpush1.msra.mxu0 %v460
          %487 = vmatprep.subr.mxu0 0.0
          %488 = vmatpush1.msra.mxu0 %v461
          %489 = vmatprep.subr.mxu0 0.0
          %490 = vmatpush1.msra.mxu0 %v462
          %491 = vmatprep.subr.mxu0 0.0
          %492 = vmatpush1.msra.mxu0 %v463
          %493 = vmatprep.subr.mxu0 0.0
          %494 = vmatpush1.msra.mxu0 %v464
          %495 = vmatprep.subr.mxu0 0.0
          %496 = vmatpush1.msra.mxu0 %v465
          %497 = vmatprep.subr.mxu0 0.0
          %498 = vmatpush1.msra.mxu0 %v466
          %499 = vmatprep.subr.mxu0 0.0
          %500 = vmatpush1.msra.mxu0 0.0
          %501 = vmatprep.subr.mxu0 0.0
          %502 = vmatpush1.msra.mxu0 0.0
          %503 = vmatprep.subr.mxu0 0.0
          %504 = vmatpush1.msra.mxu0 0.0
          %505 = vmatprep.subr.mxu0 0.0
          %506 = vmatpush1.msra.mxu0 0.0
          %507 = vmatprep.subr.mxu0 0.0
          %508 = vmatpush1.msra.mxu0 0.0
          %509 = vmatprep.subr.mxu0 0.0
          %510 = vmatpush1.msra.mxu0 0.0
          %511 = vmatprep.subr.mxu0 0.0
          %512 = vmatpush1.msra.mxu0 0.0
          %513 = vmatprep.subr.mxu0 0.0
          %514 = vmatpush1.msra.mxu0 0.0
          %515 = vmatprep.subr.mxu0 0.0
          %516 = vmatpush1.msra.mxu0 0.0
          %517 = vmatprep.subr.mxu0 0.0
          %518 = vmatpush1.msra.mxu0 0.0
          %519 = vmatprep.subr.mxu0 0.0
          %520 = vmatpush1.msra.mxu0 0.0
          %521 = vmatprep.subr.mxu0 0.0
          %522 = vmatpush1.msra.mxu0 0.0
          %523 = vmatprep.subr.mxu0 0.0
          %524 = vmatpush1.msra.mxu0 0.0
          %525 = vmatprep.subr.mxu0 0.0
          %526 = vmatpush1.msra.mxu0 0.0
          %527 = vmatprep.subr.mxu0 0.0
          %528 = vmatpush1.msra.mxu0 0.0
          %529 = vmatprep.subr.mxu0 0.0
          %530 = vmatpush1.msra.mxu0 0.0
          %531 = vmatprep.mubr.f32.mxu0 0.0
          %532 = vmatmul.mubr.f32.gmra.mrb[0].mxu0 %v450
          %v533 = vpop.f32.mrb[0].mxu0
          %v534 = vadd.f32 0.0, %v533
          %v535 = vpop.f32.mrb[0].mxu0
          %536 = vdwg.mxu0
          %537 = vst [vmem:[#allocation3] sm:$0xff] %v534
        $region84: #{tpu_custom_call.1} parent=67 // pred_fallthru
          _
        %p538 = scmp.eq.s32.totalorder %s32, 1
        %p539 = pnand %p443, %p538
        %p540 = pneg %p539
        // Predicated region
        $region85: #{tpu_custom_call.1} parent=67 // pred_check
          _
        $region86: #{tpu_custom_call.1} parent=67 // pred_check_branch
          %542 = sbr.rel (%p539) target = $region88
        $region87: #{tpu_custom_call.1} parent=67 // pred_region
          %543 = vst [vmem:[#allocation2] sm:$0xff] 0.0
          %v544 = vld [vmem:[#allocation4] sm:$0xff]
          %v545 = vld [vmem:[#allocation9] sm:$0xff]
          %v546 = vld [vmem:[#allocation9 + $0x8] sm:$0xff]
          %v547 = vld [vmem:[#allocation9 + $0x10] sm:$0xff]
          %v548 = vld [vmem:[#allocation9 + $0x18] sm:$0xff]
          %v549 = vld [vmem:[#allocation9 + $0x20] sm:$0xff]
          %v550 = vld [vmem:[#allocation9 + $0x28] sm:$0xff]
          %v551 = vld [vmem:[#allocation9 + $0x30] sm:$0xff]
          %v552 = vld [vmem:[#allocation9 + $0x38] sm:$0xff]
          %v553 = vld [vmem:[#allocation9 + $0x40] sm:$0xff]
          %v554 = vld [vmem:[#allocation9 + $0x48] sm:$0xff]
          %v555 = vld [vmem:[#allocation9 + $0x50] sm:$0xff]
          %v556 = vld [vmem:[#allocation9 + $0x58] sm:$0xff]
          %v557 = vld [vmem:[#allocation9 + $0x60] sm:$0xff]
          %v558 = vld [vmem:[#allocation9 + $0x68] sm:$0xff]
          %v559 = vld [vmem:[#allocation9 + $0x70] sm:$0xff]
          %v560 = vld [vmem:[#allocation9 + $0x78] sm:$0xff]
          %561 = vmatprep.subr.mxu0 0.0
          %562 = vmatpush1.msra.mxu0 %v545
          %563 = vmatprep.subr.mxu0 0.0
          %564 = vmatpush1.msra.mxu0 %v546
          %565 = vmatprep.subr.mxu0 0.0
          %566 = vmatpush1.msra.mxu0 %v547
          %567 = vmatprep.subr.mxu0 0.0
          %568 = vmatpush1.msra.mxu0 %v548
          %569 = vmatprep.subr.mxu0 0.0
          %570 = vmatpush1.msra.mxu0 %v549
          %571 = vmatprep.subr.mxu0 0.0
          %572 = vmatpush1.msra.mxu0 %v550
          %573 = vmatprep.subr.mxu0 0.0
          %574 = vmatpush1.msra.mxu0 %v551
          %575 = vmatprep.subr.mxu0 0.0
          %576 = vmatpush1.msra.mxu0 %v552
          %577 = vmatprep.subr.mxu0 0.0
          %578 = vmatpush1.msra.mxu0 %v553
          %579 = vmatprep.subr.mxu0 0.0
          %580 = vmatpush1.msra.mxu0 %v554
          %581 = vmatprep.subr.mxu0 0.0
          %582 = vmatpush1.msra.mxu0 %v555
          %583 = vmatprep.subr.mxu0 0.0
          %584 = vmatpush1.msra.mxu0 %v556
          %585 = vmatprep.subr.mxu0 0.0
          %586 = vmatpush1.msra.mxu0 %v557
          %587 = vmatprep.subr.mxu0 0.0
          %588 = vmatpush1.msra.mxu0 %v558
          %589 = vmatprep.subr.mxu0 0.0
          %590 = vmatpush1.msra.mxu0 %v559
          %591 = vmatprep.subr.mxu0 0.0
          %592 = vmatpush1.msra.mxu0 %v560
          %593 = vmatprep.subr.mxu0 0.0
          %594 = vmatpush1.msra.mxu0 0.0
          %595 = vmatprep.subr.mxu0 0.0
          %596 = vmatpush1.msra.mxu0 0.0
          %597 = vmatprep.subr.mxu0 0.0
          %598 = vmatpush1.msra.mxu0 0.0
          %599 = vmatprep.subr.mxu0 0.0
          %600 = vmatpush1.msra.mxu0 0.0
          %601 = vmatprep.subr.mxu0 0.0
          %602 = vmatpush1.msra.mxu0 0.0
          %603 = vmatprep.subr.mxu0 0.0
          %604 = vmatpush1.msra.mxu0 0.0
          %605 = vmatprep.subr.mxu0 0.0
          %606 = vmatpush1.msra.mxu0 0.0
          %607 = vmatprep.subr.mxu0 0.0
          %608 = vmatpush1.msra.mxu0 0.0
          %609 = vmatprep.subr.mxu0 0.0
          %610 = vmatpush1.msra.mxu0 0.0
          %611 = vmatprep.subr.mxu0 0.0
          %612 = vmatpush1.msra.mxu0 0.0
          %613 = vmatprep.subr.mxu0 0.0
          %614 = vmatpush1.msra.mxu0 0.0
          %615 = vmatprep.subr.mxu0 0.0
          %616 = vmatpush1.msra.mxu0 0.0
          %617 = vmatprep.subr.mxu0 0.0
          %618 = vmatpush1.msra.mxu0 0.0
          %619 = vmatprep.subr.mxu0 0.0
          %620 = vmatpush1.msra.mxu0 0.0
          %621 = vmatprep.subr.mxu0 0.0
          %622 = vmatpush1.msra.mxu0 0.0
          %623 = vmatprep.subr.mxu0 0.0
          %624 = vmatpush1.msra.mxu0 0.0
          %625 = vmatprep.mubr.f32.mxu0 0.0
          %626 = vmatmul.mubr.f32.gmra.mrb[0].mxu0 %v544
          %v627 = vpop.f32.mrb[0].mxu0
          %v628 = vadd.f32 0.0, %v627
          %v629 = vpop.f32.mrb[0].mxu0
          %630 = vdwg.mxu0
          %631 = vst [vmem:[#allocation3] sm:$0xff] %v628
        $region88: #{tpu_custom_call.1} parent=67 // pred_fallthru
          _
        %s632 = smul.u32 %s33, 8
        %v633 = vld [vmem:[#allocation2] sm:$0xff]
        %v634 = vld [vmem:[#allocation6] sm:$0xff]
        %s635 = scalar_lea.vmem [#allocation3], %s632
        %v636 = vld [vmem:[%s635] sm:$0xff]
        %vm637 = vcmask 64512
        %v639 = vsel %vm637, %v634, 0
        %641 = vmatprep.subr.mxu0 0.0
        %642 = vmatpush1.msra.mxu0 %v636
        %643 = vmatprep.subr.mxu0 0.0
        %644 = vmatpush1.msra.mxu0 0.0
        %645 = vmatprep.subr.mxu0 0.0
        %646 = vmatpush1.msra.mxu0 0.0
        %647 = vmatprep.subr.mxu0 0.0
        %648 = vmatpush1.msra.mxu0 0.0
        %649 = vmatprep.subr.mxu0 0.0
        %650 = vmatpush1.msra.mxu0 0.0
        %651 = vmatprep.subr.mxu0 0.0
        %652 = vmatpush1.msra.mxu0 0.0
        %653 = vmatprep.subr.mxu0 0.0
        %654 = vmatpush1.msra.mxu0 0.0
        %655 = vmatprep.subr.mxu0 0.0
        %656 = vmatpush1.msra.mxu0 0.0
        %657 = vmatprep.subr.mxu0 0.0
        %658 = vmatpush1.msra.mxu0 0.0
        %659 = vmatprep.subr.mxu0 0.0
        %660 = vmatpush1.msra.mxu0 0.0
        %661 = vmatprep.subr.mxu0 0.0
        %662 = vmatpush1.msra.mxu0 0.0
        %663 = vmatprep.subr.mxu0 0.0
        %664 = vmatpush1.msra.mxu0 0.0
        %665 = vmatprep.subr.mxu0 0.0
        %666 = vmatpush1.msra.mxu0 0.0
        %667 = vmatprep.subr.mxu0 0.0
        %668 = vmatpush1.msra.mxu0 0.0
        %669 = vmatprep.subr.mxu0 0.0
        %670 = vmatpush1.msra.mxu0 0.0
        %671 = vmatprep.subr.mxu0 0.0
        %672 = vmatpush1.msra.mxu0 0.0
        %673 = vmatprep.subr.mxu0 0.0
        %674 = vmatpush1.msra.mxu0 0.0
        %675 = vmatprep.subr.mxu0 0.0
        %676 = vmatpush1.msra.mxu0 0.0
        %677 = vmatprep.subr.mxu0 0.0
        %678 = vmatpush1.msra.mxu0 0.0
        %679 = vmatprep.subr.mxu0 0.0
        %680 = vmatpush1.msra.mxu0 0.0
        %681 = vmatprep.subr.mxu0 0.0
        %682 = vmatpush1.msra.mxu0 0.0
        %683 = vmatprep.subr.mxu0 0.0
        %684 = vmatpush1.msra.mxu0 0.0
        %685 = vmatprep.subr.mxu0 0.0
        %686 = vmatpush1.msra.mxu0 0.0
        %687 = vmatprep.subr.mxu0 0.0
        %688 = vmatpush1.msra.mxu0 0.0
        %689 = vmatprep.subr.mxu0 0.0
        %690 = vmatpush1.msra.mxu0 0.0
        %691 = vmatprep.subr.mxu0 0.0
        %692 = vmatpush1.msra.mxu0 0.0
        %693 = vmatprep.subr.mxu0 0.0
        %694 = vmatpush1.msra.mxu0 0.0
        %695 = vmatprep.subr.mxu0 0.0
        %696 = vmatpush1.msra.mxu0 0.0
        %697 = vmatprep.subr.mxu0 0.0
        %698 = vmatpush1.msra.mxu0 0.0
        %699 = vmatprep.subr.mxu0 0.0
        %700 = vmatpush1.msra.mxu0 0.0
        %701 = vmatprep.subr.mxu0 0.0
        %702 = vmatpush1.msra.mxu0 0.0
        %703 = vmatprep.subr.mxu0 0.0
        %704 = vmatpush1.msra.mxu0 0.0
        %705 = vmatprep.mubr.f32.mxu0 0.0
        %706 = vmatmul.mubr.f32.gmra.mrb[0].mxu0 %v639
        %v707 = vpop.f32.mrb[0].mxu0
        %v708 = vadd.f32 0.0, %v707
        %v709 = vpop.f32.mrb[0].mxu0
        %710 = vdwg.mxu0
        %v711 = vadd.f32 %v633, %v708
        %712 = vst [vmem:[#allocation2] sm:$0xff] %v711
        // Predicated region
        $region89: #{tpu_custom_call.1} parent=67 // pred_check
          _
        $region90: #{tpu_custom_call.1} parent=67 // pred_check_branch
          %714 = sbr.rel (%p445) target = $region92
        $region91: #{tpu_custom_call.1} parent=67 // pred_region
          %v715 = vld [vmem:[#allocation2] sm:$0xff]
          %v716 = vld [vmem:[%s1] sm:$0xff]
          %v717 = vld [vmem:[%s4] sm:$0xff]
          %v718 = vld [vmem:[%s4 + $0x8] sm:$0xff]
          %v719 = vld [vmem:[%s4 + $0x10] sm:$0xff]
          %v720 = vld [vmem:[%s4 + $0x18] sm:$0xff]
          %v721 = vld [vmem:[%s4 + $0x20] sm:$0xff]
          %v722 = vld [vmem:[%s4 + $0x28] sm:$0xff]
          %v723 = vld [vmem:[%s4 + $0x30] sm:$0xff]
          %v724 = vld [vmem:[%s4 + $0x38] sm:$0xff]
          %v725 = vld [vmem:[%s4 + $0x40] sm:$0xff]
          %v726 = vld [vmem:[%s4 + $0x48] sm:$0xff]
          %v727 = vld [vmem:[%s4 + $0x50] sm:$0xff]
          %v728 = vld [vmem:[%s4 + $0x58] sm:$0xff]
          %v729 = vld [vmem:[%s4 + $0x60] sm:$0xff]
          %v730 = vld [vmem:[%s4 + $0x68] sm:$0xff]
          %v731 = vld [vmem:[%s4 + $0x70] sm:$0xff]
          %v732 = vld [vmem:[%s4 + $0x78] sm:$0xff]
          %733 = vmatprep.subr.mxu0 0.0
          %734 = vmatpush1.msra.mxu0 %v717
          %735 = vmatprep.subr.mxu0 0.0
          %736 = vmatpush1.msra.mxu0 %v718
          %737 = vmatprep.subr.mxu0 0.0
          %738 = vmatpush1.msra.mxu0 %v719
          %739 = vmatprep.subr.mxu0 0.0
          %740 = vmatpush1.msra.mxu0 %v720
          %741 = vmatprep.subr.mxu0 0.0
          %742 = vmatpush1.msra.mxu0 %v721
          %743 = vmatprep.subr.mxu0 0.0
          %744 = vmatpush1.msra.mxu0 %v722
          %745 = vmatprep.subr.mxu0 0.0
          %746 = vmatpush1.msra.mxu0 %v723
          %747 = vmatprep.subr.mxu0 0.0
          %748 = vmatpush1.msra.mxu0 %v724
          %749 = vmatprep.subr.mxu0 0.0
          %750 = vmatpush1.msra.mxu0 %v725
          %751 = vmatprep.subr.mxu0 0.0
          %752 = vmatpush1.msra.mxu0 %v726
          %753 = vmatprep.subr.mxu0 0.0
          %754 = vmatpush1.msra.mxu0 %v727
          %755 = vmatprep.subr.mxu0 0.0
          %756 = vmatpush1.msra.mxu0 %v728
          %757 = vmatprep.subr.mxu0 0.0
          %758 = vmatpush1.msra.mxu0 %v729
          %759 = vmatprep.subr.mxu0 0.0
          %760 = vmatpush1.msra.mxu0 %v730
          %761 = vmatprep.subr.mxu0 0.0
          %762 = vmatpush1.msra.mxu0 %v731
          %763 = vmatprep.subr.mxu0 0.0
          %764 = vmatpush1.msra.mxu0 %v732
          %765 = vmatprep.subr.mxu0 0.0
          %766 = vmatpush1.msra.mxu0 0.0
          %767 = vmatprep.subr.mxu0 0.0
          %768 = vmatpush1.msra.mxu0 0.0
          %769 = vmatprep.subr.mxu0 0.0
          %770 = vmatpush1.msra.mxu0 0.0
          %771 = vmatprep.subr.mxu0 0.0
          %772 = vmatpush1.msra.mxu0 0.0
          %773 = vmatprep.subr.mxu0 0.0
          %774 = vmatpush1.msra.mxu0 0.0
          %775 = vmatprep.subr.mxu0 0.0
          %776 = vmatpush1.msra.mxu0 0.0
          %777 = vmatprep.subr.mxu0 0.0
          %778 = vmatpush1.msra.mxu0 0.0
          %779 = vmatprep.subr.mxu0 0.0
          %780 = vmatpush1.msra.mxu0 0.0
          %781 = vmatprep.subr.mxu0 0.0
          %782 = vmatpush1.msra.mxu0 0.0
          %783 = vmatprep.subr.mxu0 0.0
          %784 = vmatpush1.msra.mxu0 0.0
          %785 = vmatprep.subr.mxu0 0.0
          %786 = vmatpush1.msra.mxu0 0.0
          %787 = vmatprep.subr.mxu0 0.0
          %788 = vmatpush1.msra.mxu0 0.0
          %789 = vmatprep.subr.mxu0 0.0
          %790 = vmatpush1.msra.mxu0 0.0
          %791 = vmatprep.subr.mxu0 0.0
          %792 = vmatpush1.msra.mxu0 0.0
          %793 = vmatprep.subr.mxu0 0.0
          %794 = vmatpush1.msra.mxu0 0.0
          %795 = vmatprep.subr.mxu0 0.0
          %796 = vmatpush1.msra.mxu0 0.0
          %797 = vmatprep.mubr.f32.mxu0 0.0
          %798 = vmatmul.mubr.f32.gmra.mrb[0].mxu0 %v716
          %v799 = vpop.f32.mrb[0].mxu0
          %v800 = vadd.f32 0.0, %v799
          %v801 = vpop.f32.mrb[0].mxu0
          %802 = vdwg.mxu0
          %v803 = vadd.f32 %v715, %v800
          %v804 = vld [vmem:[%s5] sm:$0x1]
          %v806 = vlaneseq
          %v807 = vshrl.u32 %v806, 7
          %v808 = vsub.s32 0, %v807
          %v809 = vrot.slane %v804, %v808
          %v811 = vadd.f32 %v803, %v809
          %v812 = vmax.f32 %v811, 0.0
          %813 = vst [vmem:[#allocation4] sm:$0xff] %v812
        $region92: #{tpu_custom_call.1} parent=67 // pred_fallthru
          _
        // Predicated region
        $region93: #{tpu_custom_call.1} parent=67 // pred_check
          _
        $region94: #{tpu_custom_call.1} parent=67 // pred_check_branch
          %815 = sbr.rel (%p539) target = $region96
        $region95: #{tpu_custom_call.1} parent=67 // pred_region
          %v816 = vld [vmem:[#allocation2] sm:$0xff]
          %v817 = vld [vmem:[#allocation4] sm:$0xff]
          %v818 = vld [vmem:[#allocation11] sm:$0xff]
          %v819 = vld [vmem:[#allocation11 + $0x8] sm:$0xff]
          %v820 = vld [vmem:[#allocation11 + $0x10] sm:$0xff]
          %v821 = vld [vmem:[#allocation11 + $0x18] sm:$0xff]
          %v822 = vld [vmem:[#allocation11 + $0x20] sm:$0xff]
          %v823 = vld [vmem:[#allocation11 + $0x28] sm:$0xff]
          %v824 = vld [vmem:[#allocation11 + $0x30] sm:$0xff]
          %v825 = vld [vmem:[#allocation11 + $0x38] sm:$0xff]
          %v826 = vld [vmem:[#allocation11 + $0x40] sm:$0xff]
          %v827 = vld [vmem:[#allocation11 + $0x48] sm:$0xff]
          %v828 = vld [vmem:[#allocation11 + $0x50] sm:$0xff]
          %v829 = vld [vmem:[#allocation11 + $0x58] sm:$0xff]
          %v830 = vld [vmem:[#allocation11 + $0x60] sm:$0xff]
          %v831 = vld [vmem:[#allocation11 + $0x68] sm:$0xff]
          %v832 = vld [vmem:[#allocation11 + $0x70] sm:$0xff]
          %v833 = vld [vmem:[#allocation11 + $0x78] sm:$0xff]
          %834 = vmatprep.subr.mxu0 0.0
          %835 = vmatpush1.msra.mxu0 %v818
          %836 = vmatprep.subr.mxu0 0.0
          %837 = vmatpush1.msra.mxu0 %v819
          %838 = vmatprep.subr.mxu0 0.0
          %839 = vmatpush1.msra.mxu0 %v820
          %840 = vmatprep.subr.mxu0 0.0
          %841 = vmatpush1.msra.mxu0 %v821
          %842 = vmatprep.subr.mxu0 0.0
          %843 = vmatpush1.msra.mxu0 %v822
          %844 = vmatprep.subr.mxu0 0.0
          %845 = vmatpush1.msra.mxu0 %v823
          %846 = vmatprep.subr.mxu0 0.0
          %847 = vmatpush1.msra.mxu0 %v824
          %848 = vmatprep.subr.mxu0 0.0
          %849 = vmatpush1.msra.mxu0 %v825
          %850 = vmatprep.subr.mxu0 0.0
          %851 = vmatpush1.msra.mxu0 %v826
          %852 = vmatprep.subr.mxu0 0.0
          %853 = vmatpush1.msra.mxu0 %v827
          %854 = vmatprep.subr.mxu0 0.0
          %855 = vmatpush1.msra.mxu0 %v828
          %856 = vmatprep.subr.mxu0 0.0
          %857 = vmatpush1.msra.mxu0 %v829
          %858 = vmatprep.subr.mxu0 0.0
          %859 = vmatpush1.msra.mxu0 %v830
          %860 = vmatprep.subr.mxu0 0.0
          %861 = vmatpush1.msra.mxu0 %v831
          %862 = vmatprep.subr.mxu0 0.0
          %863 = vmatpush1.msra.mxu0 %v832
          %864 = vmatprep.subr.mxu0 0.0
          %865 = vmatpush1.msra.mxu0 %v833
          %866 = vmatprep.subr.mxu0 0.0
          %867 = vmatpush1.msra.mxu0 0.0
          %868 = vmatprep.subr.mxu0 0.0
          %869 = vmatpush1.msra.mxu0 0.0
          %870 = vmatprep.subr.mxu0 0.0
          %871 = vmatpush1.msra.mxu0 0.0
          %872 = vmatprep.subr.mxu0 0.0
          %873 = vmatpush1.msra.mxu0 0.0
          %874 = vmatprep.subr.mxu0 0.0
          %875 = vmatpush1.msra.mxu0 0.0
          %876 = vmatprep.subr.mxu0 0.0
          %877 = vmatpush1.msra.mxu0 0.0
          %878 = vmatprep.subr.mxu0 0.0
          %879 = vmatpush1.msra.mxu0 0.0
          %880 = vmatprep.subr.mxu0 0.0
          %881 = vmatpush1.msra.mxu0 0.0
          %882 = vmatprep.subr.mxu0 0.0
          %883 = vmatpush1.msra.mxu0 0.0
          %884 = vmatprep.subr.mxu0 0.0
          %885 = vmatpush1.msra.mxu0 0.0
          %886 = vmatprep.subr.mxu0 0.0
          %887 = vmatpush1.msra.mxu0 0.0
          %888 = vmatprep.subr.mxu0 0.0
          %889 = vmatpush1.msra.mxu0 0.0
          %890 = vmatprep.subr.mxu0 0.0
          %891 = vmatpush1.msra.mxu0 0.0
          %892 = vmatprep.subr.mxu0 0.0
          %893 = vmatpush1.msra.mxu0 0.0
          %894 = vmatprep.subr.mxu0 0.0
          %895 = vmatpush1.msra.mxu0 0.0
          %896 = vmatprep.subr.mxu0 0.0
          %897 = vmatpush1.msra.mxu0 0.0
          %898 = vmatprep.mubr.f32.mxu0 0.0
          %899 = vmatmul.mubr.f32.gmra.mrb[0].mxu0 %v817
          %v900 = vpop.f32.mrb[0].mxu0
          %v901 = vadd.f32 0.0, %v900
          %v902 = vpop.f32.mrb[0].mxu0
          %903 = vdwg.mxu0
          %v904 = vadd.f32 %v816, %v901
          %v905 = vld [vmem:[%s8] sm:$0x1]
          %v907 = vlaneseq
          %v908 = vshrl.u32 %v907, 7
          %v909 = vsub.s32 0, %v908
          %v910 = vrot.slane %v905, %v909
          %v912 = vadd.f32 %v904, %v910
          %v913 = vld [vmem:[%s9] sm:$0xff]
          %v914 = vld [vmem:[%s9 + $0x8] sm:$0xff]
          %v915 = vld [vmem:[%s9 + $0x10] sm:$0xff]
          %v916 = vld [vmem:[%s9 + $0x18] sm:$0xff]
          %v917 = vld [vmem:[%s9 + $0x20] sm:$0xff]
          %v918 = vld [vmem:[%s9 + $0x28] sm:$0xff]
          %v919 = vld [vmem:[%s9 + $0x30] sm:$0xff]
          %v920 = vld [vmem:[%s9 + $0x38] sm:$0xff]
          %v921 = vld [vmem:[%s9 + $0x40] sm:$0xff]
          %v922 = vld [vmem:[%s9 + $0x48] sm:$0xff]
          %v923 = vld [vmem:[%s9 + $0x50] sm:$0xff]
          %v924 = vld [vmem:[%s9 + $0x58] sm:$0xff]
          %v925 = vld [vmem:[%s9 + $0x60] sm:$0xff]
          %v926 = vld [vmem:[%s9 + $0x68] sm:$0xff]
          %v927 = vld [vmem:[%s9 + $0x70] sm:$0xff]
          %v928 = vld [vmem:[%s9 + $0x78] sm:$0xff]
          %929 = vmatprep.subr.mxu0 0.0
          %930 = vmatpush1.msra.mxu0 %v913
          %931 = vmatprep.subr.mxu0 0.0
          %932 = vmatpush1.msra.mxu0 %v914
          %933 = vmatprep.subr.mxu0 0.0
          %934 = vmatpush1.msra.mxu0 %v915
          %935 = vmatprep.subr.mxu0 0.0
          %936 = vmatpush1.msra.mxu0 %v916
          %937 = vmatprep.subr.mxu0 0.0
          %938 = vmatpush1.msra.mxu0 %v917
          %939 = vmatprep.subr.mxu0 0.0
          %940 = vmatpush1.msra.mxu0 %v918
          %941 = vmatprep.subr.mxu0 0.0
          %942 = vmatpush1.msra.mxu0 %v919
          %943 = vmatprep.subr.mxu0 0.0
          %944 = vmatpush1.msra.mxu0 %v920
          %945 = vmatprep.subr.mxu0 0.0
          %946 = vmatpush1.msra.mxu0 %v921
          %947 = vmatprep.subr.mxu0 0.0
          %948 = vmatpush1.msra.mxu0 %v922
          %949 = vmatprep.subr.mxu0 0.0
          %950 = vmatpush1.msra.mxu0 %v923
          %951 = vmatprep.subr.mxu0 0.0
          %952 = vmatpush1.msra.mxu0 %v924
          %953 = vmatprep.subr.mxu0 0.0
          %954 = vmatpush1.msra.mxu0 %v925
          %955 = vmatprep.subr.mxu0 0.0
          %956 = vmatpush1.msra.mxu0 %v926
          %957 = vmatprep.subr.mxu0 0.0
          %958 = vmatpush1.msra.mxu0 %v927
          %959 = vmatprep.subr.mxu0 0.0
          %960 = vmatpush1.msra.mxu0 %v928
          %961 = vmatprep.subr.mxu0 0.0
          %962 = vmatpush1.msra.mxu0 0.0
          %963 = vmatprep.subr.mxu0 0.0
          %964 = vmatpush1.msra.mxu0 0.0
          %965 = vmatprep.subr.mxu0 0.0
          %966 = vmatpush1.msra.mxu0 0.0
          %967 = vmatprep.subr.mxu0 0.0
          %968 = vmatpush1.msra.mxu0 0.0
          %969 = vmatprep.subr.mxu0 0.0
          %970 = vmatpush1.msra.mxu0 0.0
          %971 = vmatprep.subr.mxu0 0.0
          %972 = vmatpush1.msra.mxu0 0.0
          %973 = vmatprep.subr.mxu0 0.0
          %974 = vmatpush1.msra.mxu0 0.0
          %975 = vmatprep.subr.mxu0 0.0
          %976 = vmatpush1.msra.mxu0 0.0
          %977 = vmatprep.subr.mxu0 0.0
          %978 = vmatpush1.msra.mxu0 0.0
          %979 = vmatprep.subr.mxu0 0.0
          %980 = vmatpush1.msra.mxu0 0.0
          %981 = vmatprep.subr.mxu0 0.0
          %982 = vmatpush1.msra.mxu0 0.0
          %983 = vmatprep.subr.mxu0 0.0
          %984 = vmatpush1.msra.mxu0 0.0
          %985 = vmatprep.subr.mxu0 0.0
          %986 = vmatpush1.msra.mxu0 0.0
          %987 = vmatprep.subr.mxu0 0.0
          %988 = vmatpush1.msra.mxu0 0.0
          %989 = vmatprep.subr.mxu0 0.0
          %990 = vmatpush1.msra.mxu0 0.0
          %991 = vmatprep.subr.mxu0 0.0
          %992 = vmatpush1.msra.mxu0 0.0
          %993 = vmatprep.mubr.f32.mxu0 0.0
          %994 = vmatmul.mubr.f32.gmra.mrb[0].mxu0 %v912
          %v995 = vpop.f32.mrb[0].mxu0
          %v996 = vadd.f32 0.0, %v995
          %v997 = vpop.f32.mrb[0].mxu0
          %998 = vdwg.mxu0
          %v999 = vld [vmem:[%s10] sm:$0xff]
          %v1000 = vld [vmem:[%s10 + $0x8] sm:$0xff]
          %v1001 = vld [vmem:[%s10 + $0x10] sm:$0xff]
          %v1002 = vld [vmem:[%s10 + $0x18] sm:$0xff]
          %v1003 = vld [vmem:[%s10 + $0x20] sm:$0xff]
          %v1004 = vld [vmem:[%s10 + $0x28] sm:$0xff]
          %v1005 = vld [vmem:[%s10 + $0x30] sm:$0xff]
          %v1006 = vld [vmem:[%s10 + $0x38] sm:$0xff]
          %v1007 = vld [vmem:[%s10 + $0x40] sm:$0xff]
          %v1008 = vld [vmem:[%s10 + $0x48] sm:$0xff]
          %v1009 = vld [vmem:[%s10 + $0x50] sm:$0xff]
          %v1010 = vld [vmem:[%s10 + $0x58] sm:$0xff]
          %v1011 = vld [vmem:[%s10 + $0x60] sm:$0xff]
          %v1012 = vld [vmem:[%s10 + $0x68] sm:$0xff]
          %v1013 = vld [vmem:[%s10 + $0x70] sm:$0xff]
          %v1014 = vld [vmem:[%s10 + $0x78] sm:$0xff]
          %1015 = vmatprep.subr.mxu0 0.0
          %1016 = vmatpush1.msra.mxu0 %v999
          %1017 = vmatprep.subr.mxu0 0.0
          %1018 = vmatpush1.msra.mxu0 %v1000
          %1019 = vmatprep.subr.mxu0 0.0
          %1020 = vmatpush1.msra.mxu0 %v1001
          %1021 = vmatprep.subr.mxu0 0.0
          %1022 = vmatpush1.msra.mxu0 %v1002
          %1023 = vmatprep.subr.mxu0 0.0
          %1024 = vmatpush1.msra.mxu0 %v1003
          %1025 = vmatprep.subr.mxu0 0.0
          %1026 = vmatpush1.msra.mxu0 %v1004
          %1027 = vmatprep.subr.mxu0 0.0
          %1028 = vmatpush1.msra.mxu0 %v1005
          %1029 = vmatprep.subr.mxu0 0.0
          %1030 = vmatpush1.msra.mxu0 %v1006
          %1031 = vmatprep.subr.mxu0 0.0
          %1032 = vmatpush1.msra.mxu0 %v1007
          %1033 = vmatprep.subr.mxu0 0.0
          %1034 = vmatpush1.msra.mxu0 %v1008
          %1035 = vmatprep.subr.mxu0 0.0
          %1036 = vmatpush1.msra.mxu0 %v1009
          %1037 = vmatprep.subr.mxu0 0.0
          %1038 = vmatpush1.msra.mxu0 %v1010
          %1039 = vmatprep.subr.mxu0 0.0
          %1040 = vmatpush1.msra.mxu0 %v1011
          %1041 = vmatprep.subr.mxu0 0.0
          %1042 = vmatpush1.msra.mxu0 %v1012
          %1043 = vmatprep.subr.mxu0 0.0
          %1044 = vmatpush1.msra.mxu0 %v1013
          %1045 = vmatprep.subr.mxu0 0.0
          %1046 = vmatpush1.msra.mxu0 %v1014
          %1047 = vmatprep.subr.mxu0 0.0
          %1048 = vmatpush1.msra.mxu0 0.0
          %1049 = vmatprep.subr.mxu0 0.0
          %1050 = vmatpush1.msra.mxu0 0.0
          %1051 = vmatprep.subr.mxu0 0.0
          %1052 = vmatpush1.msra.mxu0 0.0
          %1053 = vmatprep.subr.mxu0 0.0
          %1054 = vmatpush1.msra.mxu0 0.0
          %1055 = vmatprep.subr.mxu0 0.0
          %1056 = vmatpush1.msra.mxu0 0.0
          %1057 = vmatprep.subr.mxu0 0.0
          %1058 = vmatpush1.msra.mxu0 0.0
          %1059 = vmatprep.subr.mxu0 0.0
          %1060 = vmatpush1.msra.mxu0 0.0
          %1061 = vmatprep.subr.mxu0 0.0
          %1062 = vmatpush1.msra.mxu0 0.0
          %1063 = vmatprep.subr.mxu0 0.0
          %1064 = vmatpush1.msra.mxu0 0.0
          %1065 = vmatprep.subr.mxu0 0.0
          %1066 = vmatpush1.msra.mxu0 0.0
          %1067 = vmatprep.subr.mxu0 0.0
          %1068 = vmatpush1.msra.mxu0 0.0
          %1069 = vmatprep.subr.mxu0 0.0
          %1070 = vmatpush1.msra.mxu0 0.0
          %1071 = vmatprep.subr.mxu0 0.0
          %1072 = vmatpush1.msra.mxu0 0.0
          %1073 = vmatprep.subr.mxu0 0.0
          %1074 = vmatpush1.msra.mxu0 0.0
          %1075 = vmatprep.subr.mxu0 0.0
          %1076 = vmatpush1.msra.mxu0 0.0
          %1077 = vmatprep.subr.mxu0 0.0
          %1078 = vmatpush1.msra.mxu0 0.0
          %1079 = vmatprep.mubr.f32.mxu0 0.0
          %1080 = vmatmul.mubr.f32.gmra.mrb[0].mxu0 %v912
          %v1081 = vpop.f32.mrb[0].mxu0
          %v1082 = vadd.f32 0.0, %v1081
          %v1083 = vpop.f32.mrb[0].mxu0
          %1084 = vdwg.mxu0
          %v1085 = vlaneseq
          %v1086 = vshrl.u32 %v1085, 7
          %v1087 = vld [vmem:[%s2] sm:$0x1]
          %v1088 = vlaneseq
          %v1089 = vshrl.u32 %v1088, 7
          %v1090 = vsub.s32 0, %v1089
          %v1091 = vrot.slane %v1087, %v1090
          %vm1092 = vcmp.eq.s32.totalorder %v1086, %v1091
          %v1093 = vsel %vm1092, 1, 0
          %v1094 = vcvt.s32.f32 %v1093
          %v1095 = vld [vmem:[%s2 + $0x1] sm:$0x1]
          %v1096 = vlaneseq
          %v1097 = vshrl.u32 %v1096, 7
          %v1098 = vsub.s32 0, %v1097
          %v1099 = vrot.slane %v1095, %v1098
          %vm1100 = vcmp.eq.s32.totalorder %v1086, %v1099
          %v1101 = vsel %vm1100, 1, 0
          %v1102 = vcvt.s32.f32 %v1101
          %1104 = vset.pattern.permute.xlu0 0
          %1105 = vperm.xlu0 %1104, %v996
          %v1106 = vpop.permute.xlu0 %1105
          %v1108 = vmul.f32 %v1094, %v1106
          %1110 = vset.pattern.permute.xlu0 0
          %1111 = vperm.xlu0 %1110, %v1082
          %v1112 = vpop.permute.xlu0 %1111
          %v1114 = vmul.f32 %v1102, %v1112
          %v1115 = vadd.f32 %v1108, %v1114
          %v1116 = vrot.slane %v1115, 4
          %v1117 = vadd.f32 %v1115, %v1116
          %v1118 = vrot.slane %v1117, 2
          %v1119 = vadd.f32 %v1117, %v1118
          %v1120 = vrot.slane %v1119, 1
          %v1121 = vadd.f32 %v1119, %v1120
          %v1122 = vld [vmem:[#allocation5] sm:$0x1]
          %1124 = vset.pattern.permute.xlu0 0
          %1125 = vperm.xlu0 %1124, %v1122
          %v1126 = vpop.permute.xlu0 %1125
          %v1128 = vlaneseq
          %v1129 = vshrl.u32 %v1128, 7
          %v1130 = vsub.s32 0, %v1129
          %v1131 = vrot.slane %v1126, %v1130
          %v1132 = vadd.f32 %v1121, %v1131
          %v1133 = vsub.f32 0.0, %v1132
          %v1134 = vmul.f32 %v1133, 1.442695
          %v1135 = vpow.pop %v1134
          %v1136 = vadd.f32 %v1135, 1.0
          %v1137 = vrcp.pop %v1136
          %v1138 = vmul.f32 1.0, %v1137
          %1139 = vst [vmem:[#allocation12] sm:$0x1] %v1138
        $region96: #{tpu_custom_call.1} parent=67 // pred_fallthru
          _
        // Predicated region
        $region97: #{tpu_custom_call.1} parent=67 // pred_check
          %p1140 = pneg %p310
        $region98: #{tpu_custom_call.1} parent=67 // pred_check_branch
          %1142 = sbr.rel (%p1140) target = $region100
        $region99: #{tpu_custom_call.1} parent=67 // pred_region
          %s1144 = ssub.s32 16, 16
          %1145 = vsyncadd [#allocation8], %s1144
          %s1147 = sshll.u32 [#allocation12], 4
          %s1148 = int_to_ptr.vmem [resolvable:$true] %s1147
          %1150 = dma.vmem_to_hbm [thread:$0]  %s1148, 16, %s12, [#allocation8]
        $region100: #{tpu_custom_call.1} parent=67 // pred_fallthru
          _
        // Predicated region
        $region101: #{tpu_custom_call.1} parent=67 // pred_check
          %p1151 = pneg %p310
        $region102: #{tpu_custom_call.1} parent=67 // pred_check_branch
          %1153 = sbr.rel (%p1151) target = $region104
        $region103: #{tpu_custom_call.1} parent=67 // pred_region
          %1154 = dma.done [#allocation8], 16
        $region104: #{tpu_custom_call.1} parent=67 // pred_fallthru
          _
      $region68: #{tpu_custom_call.1} parent=5 // pred_fallthru
        _
      %p1155 = scmp.le.s32.totalorder 2, %s23
      // Predicated region
      $region105: #{tpu_custom_call.1} parent=5 // pred_check
        %p1156 = pneg %p1155
      $region106: #{tpu_custom_call.1} parent=5 // pred_check_branch
        %1158 = sbr.rel (%p1156) target = $region108
      $region107: #{tpu_custom_call.1} parent=5 // pred_region
        %s1159 = ssub.s32 %s23, 2
      $region108: #{tpu_custom_call.1} parent=5 // pred_fallthru
        _
    $region6: #{tpu_custom_call.1} parent=1 // loop_footer
      %s27 = sadd.s32 1, %s23
    $region7: #{tpu_custom_call.1} parent=1 // loop_footer_branch
      %22 = sbr.rel target = $region3
    $region8: #{tpu_custom_call.1} parent=1 // loop_exit
      _
    %1160 = vsyncpa [#allocation7], 1
    %s1161 = scalar_lea.sflag [#allocation7], 1
    %1162 = vsyncpa %s1161, 1
    %1163 = vsyncpa [#allocation10], 1
    %1164 = vsyncpa [#allocation8], 1
    %s1165 = scalar_lea.sflag [#allocation8], 1
    %1166 = vsyncpa %s1165, 1

</llo_original>
